<compile_context>
chip_gen: v6e
topology: v6e:2x2x1
jax: 0.10.0
libtpu: 0.0.40
codegen_flags: <defaults>
</compile_context>

<pallas_src>
import functools

import jax
import jax.numpy as jnp
from jax.experimental import pallas as pl
from jax.experimental.pallas import tpu as pltpu

LANE = 128
VMEM_RAISE_ABOVE = 14 * 1024 * 1024   # v5e default scoped VMEM limit is ~16 MiB


def _round_up(x, m):
    return (x + m - 1) // m * m


def _vmem_capacity_bytes():
    try:
        info = pltpu.get_tpu_info()
        cap = getattr(info, "vmem_capacity_bytes", None)
        if cap:
            return int(cap)
    except Exception:
        pass
    return 64 * 1024 * 1024            # conservative default (v7x per-core VMEM)


# ----------------------------------------------------------------------------
# Fused kernel: a run of consecutive layers for one row tile.
# Weights/biases are VMEM-resident (grid-invariant blocks, single-buffered).
# ----------------------------------------------------------------------------
def _fused_mlp_kernel(*refs, n_layers, acts, matmul_dtype):
    # refs = (x_ref, w0, b0, w1, b1, ..., o_ref)
    x_ref = refs[0]
    o_ref = refs[-1]
    h = x_ref[...].astype(matmul_dtype)
    for li in range(n_layers):
        w_ref = refs[1 + 2 * li]
        b_ref = refs[2 + 2 * li]
        acc = jnp.dot(h, w_ref[...], preferred_element_type=jnp.float32)
        acc = acc + b_ref[...].astype(jnp.float32)
        if acts[li]:
            acc = acc * jax.nn.sigmoid(acc)           # SiLU, f32 epilogue (v5e-safe)
        h = acc.astype(matmul_dtype) if li < n_layers - 1 else acc
    o_ref[...] = h.astype(o_ref.dtype)


def _const_spec(shape, single_buffer):
    idx = lambda i: (0,) * len(shape)
    if single_buffer:
        try:
            return pl.BlockSpec(shape, idx, pipeline_mode=pl.Buffered(1))
        except Exception:
            pass
    return pl.BlockSpec(shape, idx)


def _fused_mlp_call(xp, ws, bs, acts, tm, out_dtype, vmem_limit, matmul_dtype,
                    single_buffer_weights):
    M_pad, K0 = xp.shape
    N_last = ws[-1].shape[1]
    n_layers = len(ws)

    in_specs = [pl.BlockSpec((tm, K0), lambda i: (i, 0))]          # row tile of x
    inputs = [xp]
    for w, b in zip(ws, bs):
        in_specs.append(_const_spec(w.shape, single_buffer_weights))   # resident W
        in_specs.append(_const_spec(b.shape, single_buffer_weights))   # resident b
        inputs += [w, b]

    kernel = functools.partial(
        _fused_mlp_kernel, n_layers=n_layers, acts=tuple(acts),
        matmul_dtype=matmul_dtype)

    return pl.pallas_call(
        kernel,
        out_shape=jax.ShapeDtypeStruct((M_pad, N_last), out_dtype),
        grid_spec=pltpu.PrefetchScalarGridSpec(
            num_scalar_prefetch=0,
            grid=(pl.cdiv(M_pad, tm),),           # partial last tile masked by Pallas
            in_specs=in_specs,
            out_specs=pl.BlockSpec((tm, N_last), lambda i: (i, 0)),
        ),
        compiler_params=pltpu.CompilerParams(
            dimension_semantics=("parallel",),
            vmem_limit_bytes=vmem_limit,
        ),
    )(*inputs)


def _fused_segment(xp, ws, bs, acts, tm, out_dtype, vmem_limit, matmul_dtype):
    try:
        return _fused_mlp_call(xp, ws, bs, acts, tm, out_dtype, vmem_limit,
                               matmul_dtype, single_buffer_weights=True)
    except Exception:
        # TODO(synk): pl.Buffered(1) single-buffering not accepted on this jax
        # version / lowering; retry with default double-buffered weight specs.
        return _fused_mlp_call(xp, ws, bs, acts, tm, out_dtype, vmem_limit,
                               matmul_dtype, single_buffer_weights=False)


# ----------------------------------------------------------------------------
# Column-tiled kernel for single layers whose weights don't fit resident.
# ----------------------------------------------------------------------------
def _linear_act_kernel(x_ref, w_ref, b_ref, o_ref, *, apply_act, matmul_dtype):
    acc = jnp.dot(x_ref[...].astype(matmul_dtype),
                  w_ref[...].astype(matmul_dtype),
                  preferred_element_type=jnp.float32)
    acc = acc + b_ref[...].astype(jnp.float32)
    if apply_act:
        acc = acc * jax.nn.sigmoid(acc)
    o_ref[...] = acc.astype(o_ref.dtype)


def _pick_tn(n_pad):
    for tn in (512, 256, 128):
        if n_pad % tn == 0:
            return tn
    return n_pad


def _linear_act(x, w, b, *, apply_act, tm, matmul_dtype, out_dtype):
    M, K = x.shape
    N = w.shape[1]
    tn = _pick_tn(N)
    gm = pl.cdiv(M, tm)
    gn = N // tn
    kernel = functools.partial(
        _linear_act_kernel, apply_act=apply_act, matmul_dtype=matmul_dtype)

    x_bytes = M * K * x.dtype.itemsize
    w_bytes = K * N * w.dtype.itemsize
    if x_bytes > w_bytes:
        # Rows innermost: the (K, tn) weight block index depends only on the
        # outer axis, so each weight column tile is streamed from HBM once.
        grid = (gn, gm)
        in_specs = [pl.BlockSpec((tm, K), lambda j, i: (i, 0)),
                    pl.BlockSpec((K, tn), lambda j, i: (0, j)),
                    pl.BlockSpec((1, tn), lambda j, i: (0, j))]
        out_specs = pl.BlockSpec((tm, tn), lambda j, i: (i, j))
    else:
        # Columns innermost: each x row tile is streamed once.
        grid = (gm, gn)
        in_specs = [pl.BlockSpec((tm, K), lambda i, j: (i, 0)),
                    pl.BlockSpec((K, tn), lambda i, j: (0, j)),
                    pl.BlockSpec((1, tn), lambda i, j: (0, j))]
        out_specs = pl.BlockSpec((tm, tn), lambda i, j: (i, j))

    # TODO(synk): for (K, tn) blocks that still overflow VMEM, a K-reduction
    # grid axis with a pl.when-initialized f32 accumulator would be needed.
    return pl.pallas_call(
        kernel,
        out_shape=jax.ShapeDtypeStruct((M, N), out_dtype),
        grid_spec=pltpu.PrefetchScalarGridSpec(
            num_scalar_prefetch=0,
            grid=grid,
            in_specs=in_specs,
            out_specs=out_specs,
        ),
        compiler_params=pltpu.CompilerParams(
            dimension_semantics=("parallel", "parallel"),
        ),
    )(x, w, b)


# ----------------------------------------------------------------------------
# VMEM estimate (single-buffered resident weights + f32 epilogue temps)
# ----------------------------------------------------------------------------
def _fused_estimate(tm, padded, start, stop, matmul_bytes):
    k0, n_last = padded[start], padded[stop]
    est = 2 * tm * k0 * 4                         # double-buffered input tiles
    est += 2 * tm * n_last * 4                    # double-buffered output tiles
    for li in range(start, stop):
        est += padded[li] * padded[li + 1] * matmul_bytes + padded[li + 1] * 4
    est += 6 * tm * max(padded[start:stop + 1]) * 4   # f32 epilogue temps + slack
    return est


# ----------------------------------------------------------------------------
# One-time parameter preparation (pad to lane multiples, cast to bf16).
# Cache and reuse the result across forward calls.
# ----------------------------------------------------------------------------
def prepare_mlp_params(params, *, matmul_dtype=jnp.bfloat16):
    sizes = [params[0][0].shape[0]] + [w.shape[1] for w, _ in params]
    padded = [_round_up(s, LANE) for s in sizes]
    ws, bs = [], []
    for li, (w, b) in enumerate(params):
        Kp, Np = padded[li], padded[li + 1]
        if w.shape == (Kp, Np):
            wp = w.astype(matmul_dtype)
        else:
            wp = jnp.zeros((Kp, Np), matmul_dtype).at[:w.shape[0], :w.shape[1]].set(
                w.astype(matmul_dtype))
        if b.shape[0] == Np:
            bp = b.astype(jnp.float32).reshape(1, Np)
        else:
            bp = jnp.zeros((1, Np), jnp.float32).at[0, :b.shape[0]].set(
                b.astype(jnp.float32))
        ws.append(wp)
        bs.append(bp)
    return dict(ws=ws, bs=bs, sizes=sizes, padded=padded, matmul_dtype=matmul_dtype)


# ----------------------------------------------------------------------------
# Apply the whole MLP to 2-D rows x2d:(M, feat)
# ----------------------------------------------------------------------------
def mlp_apply(x2d, prepared, *, tm=256, out_dtype=None, fused_vmem_budget=None):
    ws, bs = prepared["ws"], prepared["bs"]
    sizes, padded = prepared["sizes"], prepared["padded"]
    matmul_dtype = prepared["matmul_dtype"]
    mb = jnp.dtype(matmul_dtype).itemsize
    n_layers = len(ws)

    M, feat = x2d.shape
    assert feat == sizes[0], (feat, sizes[0])
    final_dtype = out_dtype if out_dtype is not None else x2d.dtype

    # Rows: pad only to the sublane multiple; skip the copy when aligned.
    M_pad = _round_up(M, 8)
    if M_pad == M and feat == padded[0]:
        xp = x2d
    else:
        xp = jnp.zeros((M_pad, padded[0]), x2d.dtype).at[:M, :feat].set(x2d)

    # Row-tile selection.
    tm_eff = min(tm, M_pad)
    tm_eff = max(8, tm_eff - tm_eff % 8)
    if max(padded) >= 1024 and tm_eff > 128:
        tm_eff = 128                                   # keep f32 epilogue temps small
    while pl.cdiv(M_pad, tm_eff) < 2 and tm_eff > 8:   # >=2 steps: both v7x TCs busy
        tm_eff = max(8, (tm_eff // 2) // 8 * 8)

    capacity = _vmem_capacity_bytes()
    budget = fused_vmem_budget if fused_vmem_budget is not None else int(capacity * 0.75)
    limit_cap = int(capacity * 0.85)

    acts = [li < n_layers - 1 for li in range(n_layers)]   # SiLU on all but last

    # Greedy partial fusion: group consecutive layers whose resident weights fit.
    segments = []
    li = 0
    while li < n_layers:
        if _fused_estimate(tm_eff, padded, li, li + 1, mb) > budget:
            segments.append(("col", li, li + 1))
            li += 1
            continue
        stop = li + 1
        while stop < n_layers and _fused_estimate(tm_eff, padded, li, stop + 1, mb) <= budget:
            stop += 1
        segments.append(("fused", li, stop))
        li = stop

    h = xp
    for si, (kind, start, stop) in enumerate(segments):
        last_seg = si == len(segments) - 1
        seg_dtype = final_dtype if last_seg else matmul_dtype   # bf16 between segments
        if kind == "fused":
            est = _fused_estimate(tm_eff, padded, start, stop, mb)
            vmem_limit = None
            if est > VMEM_RAISE_ABOVE:
                vmem_limit = min(est + (8 << 20), limit_cap)
            h = _fused_segment(h, ws[start:stop], bs[start:stop], acts[start:stop],
                               tm_eff, seg_dtype, vmem_limit, matmul_dtype)
        else:
            h = _linear_act(h, ws[start], bs[start], apply_act=acts[start],
                            tm=tm_eff, matmul_dtype=matmul_dtype,
                            out_dtype=seg_dtype)

    return h[:M, :sizes[-1]]


# ----------------------------------------------------------------------------
# MLP container (mirrors GraphMLP.MLP.forward: loop layers, return (out, None))
# ----------------------------------------------------------------------------
def init_mlp_params(key, sizes, dtype=jnp.float32):
    params = []
    for fan_in, fan_out in zip(sizes[:-1], sizes[1:]):
        key, wk = jax.random.split(key)
        scale = jnp.sqrt(2.0 / (fan_in + fan_out)).astype(dtype)
        w = jax.random.normal(wk, (fan_in, fan_out), dtype=dtype) * scale
        b = jnp.zeros((fan_out,), dtype=dtype)
        params.append((w, b))
    return params


def mlp_forward(outputs, prepared, *, tm=256, out_dtype=None, fused_vmem_budget=None):
    """Equivalent of MLP.forward: sequentially apply layers, return (out, None)."""
    batch, nodes, feat = outputs.shape
    x = outputs.reshape(batch * nodes, feat)
    y = mlp_apply(x, prepared, tm=tm, out_dtype=out_dtype,
                  fused_vmem_budget=fused_vmem_budget)
    return (y.reshape(batch, nodes, -1), None)


# ----------------------------------------------------------------------------
# Demo / smoke test
# ----------------------------------------------------------------------------
if __name__ == "__main__":
    key = jax.random.PRNGKey(0)
    key, xk, pk = jax.random.split(key, 3)

    batch, nodes, feat = 2, 16, 32
    hidden_sizes = [feat, 64, 32, 16]       # 3 MLP layers

    x = jax.random.normal(xk, (batch, nodes, feat), dtype=jnp.float32)
    params = init_mlp_params(pk, hidden_sizes)

    # One-time preparation (pad + bf16 cast); reuse across calls.
    prepared = prepare_mlp_params(params)

    # Fused path (primary).
    out, aux = mlp_forward(x, prepared)
    out = jax.block_until_ready(out)
    assert aux is None
    assert out.shape == (batch, nodes, hidden_sizes[-1]), out.shape

    # Exercise the partial-fusion / column-tiled fallback path explicitly.
    out_fb, _ = mlp_forward(x, prepared, fused_vmem_budget=0)
    out_fb = jax.block_until_ready(out_fb)
    assert out_fb.shape == out.shape

    # Pure-JAX reference with the same bf16-input / f32-accum recipe.
    h = x.reshape(batch * nodes, feat)
    for li, (w, b) in enumerate(params):
        h = jnp.dot(h.astype(jnp.bfloat16), w.astype(jnp.bfloat16),
                    preferred_element_type=jnp.float32) + b
        if li < len(params) - 1:
            h = h * jax.nn.sigmoid(h)
    ref = h.reshape(batch, nodes, -1)

    assert jnp.allclose(out, ref, atol=1e-2, rtol=1e-2), \
        float(jnp.max(jnp.abs(out - ref)))
    assert jnp.allclose(out_fb, ref, atol=1e-2, rtol=1e-2), \
        float(jnp.max(jnp.abs(out_fb - ref)))

    print("KERNEL_OK")
</pallas_src>

<mosaic_0001>
module attributes {stable_mosaic.version = 11 : i64} {
  func.func @_fused_mlp_kernel(%arg0: i32, %arg1: memref<16x128xf32, #tpu.memory_space<vmem>>, %arg2: memref<128x128xbf16, #tpu.memory_space<vmem>>, %arg3: memref<1x128xf32, #tpu.memory_space<vmem>>, %arg4: memref<128x128xbf16, #tpu.memory_space<vmem>>, %arg5: memref<1x128xf32, #tpu.memory_space<vmem>>, %arg6: memref<128x128xbf16, #tpu.memory_space<vmem>>, %arg7: memref<1x128xf32, #tpu.memory_space<vmem>>, %arg8: memref<16x128xf32, #tpu.memory_space<vmem>>) attributes {dimension_semantics = [#tpu.dimension_semantics<parallel>], iteration_bounds = array<i64: 2>, scalar_prefetch = 0 : i64, scratch_operands = 0 : i64, tpu.core_type = #tpu.core_type<tc>, window_params = [{transform_indices = @transform_0, window_bounds = array<i64: 16, 128>}, {pipeline_mode = #tpu.pipeline_mode<synchronous>, transform_indices = @transform_1, window_bounds = array<i64: 128, 128>}, {pipeline_mode = #tpu.pipeline_mode<synchronous>, transform_indices = @transform_2, window_bounds = array<i64: 1, 128>}, {pipeline_mode = #tpu.pipeline_mode<synchronous>, transform_indices = @transform_3, window_bounds = array<i64: 128, 128>}, {pipeline_mode = #tpu.pipeline_mode<synchronous>, transform_indices = @transform_4, window_bounds = array<i64: 1, 128>}, {pipeline_mode = #tpu.pipeline_mode<synchronous>, transform_indices = @transform_5, window_bounds = array<i64: 128, 128>}, {pipeline_mode = #tpu.pipeline_mode<synchronous>, transform_indices = @transform_6, window_bounds = array<i64: 1, 128>}, {transform_indices = @transform_7, window_bounds = array<i64: 16, 128>}]} {
    %c0 = arith.constant 0 : index
    %c0_0 = arith.constant 0 : index
    %0 = vector.load %arg1[%c0, %c0_0] : memref<16x128xf32, #tpu.memory_space<vmem>>, vector<16x128xf32>
    %1 = arith.truncf %0 : vector<16x128xf32> to vector<16x128xbf16>
    %c0_1 = arith.constant 0 : index
    %c0_2 = arith.constant 0 : index
    %2 = vector.load %arg2[%c0_1, %c0_2] : memref<128x128xbf16, #tpu.memory_space<vmem>>, vector<128x128xbf16>
    %cst = arith.constant dense<0.000000e+00> : vector<16x128xf32>
    %3 = tpu.matmul %1, %2, %cst {dimension_numbers = #tpu.dot_dimension_numbers<[1], [0], [0], [1], [0, 0, 1, 1], [], []>} : vector<16x128xbf16>, vector<128x128xbf16>, vector<16x128xf32> -> vector<16x128xf32>
    %c0_3 = arith.constant 0 : index
    %c0_4 = arith.constant 0 : index
    %4 = vector.load %arg3[%c0_3, %c0_4] : memref<1x128xf32, #tpu.memory_space<vmem>>, vector<1x128xf32>
    %5 = vector.broadcast %4 : vector<1x128xf32> to vector<16x128xf32>
    %6 = arith.addf %3, %5 : vector<16x128xf32>
    %7 = arith.negf %6 : vector<16x128xf32>
    %8 = math.exp %7 : vector<16x128xf32>
    %cst_5 = arith.constant 1.000000e+00 : f32
    %9 = vector.broadcast %cst_5 : f32 to vector<16x128xf32>
    %10 = arith.addf %9, %8 : vector<16x128xf32>
    %11 = arith.divf %9, %10 : vector<16x128xf32>
    %12 = arith.mulf %6, %11 : vector<16x128xf32>
    %13 = arith.truncf %12 : vector<16x128xf32> to vector<16x128xbf16>
    %c0_6 = arith.constant 0 : index
    %c0_7 = arith.constant 0 : index
    %14 = vector.load %arg4[%c0_6, %c0_7] : memref<128x128xbf16, #tpu.memory_space<vmem>>, vector<128x128xbf16>
    %cst_8 = arith.constant dense<0.000000e+00> : vector<16x128xf32>
    %15 = tpu.matmul %13, %14, %cst_8 {dimension_numbers = #tpu.dot_dimension_numbers<[1], [0], [0], [1], [0, 0, 1, 1], [], []>} : vector<16x128xbf16>, vector<128x128xbf16>, vector<16x128xf32> -> vector<16x128xf32>
    %c0_9 = arith.constant 0 : index
    %c0_10 = arith.constant 0 : index
    %16 = vector.load %arg5[%c0_9, %c0_10] : memref<1x128xf32, #tpu.memory_space<vmem>>, vector<1x128xf32>
    %17 = vector.broadcast %16 : vector<1x128xf32> to vector<16x128xf32>
    %18 = arith.addf %15, %17 : vector<16x128xf32>
    %19 = arith.negf %18 : vector<16x128xf32>
    %20 = math.exp %19 : vector<16x128xf32>
    %cst_11 = arith.constant 1.000000e+00 : f32
    %21 = vector.broadcast %cst_11 : f32 to vector<16x128xf32>
    %22 = arith.addf %21, %20 : vector<16x128xf32>
    %23 = arith.divf %21, %22 : vector<16x128xf32>
    %24 = arith.mulf %18, %23 : vector<16x128xf32>
    %25 = arith.truncf %24 : vector<16x128xf32> to vector<16x128xbf16>
    %c0_12 = arith.constant 0 : index
    %c0_13 = arith.constant 0 : index
    %26 = vector.load %arg6[%c0_12, %c0_13] : memref<128x128xbf16, #tpu.memory_space<vmem>>, vector<128x128xbf16>
    %cst_14 = arith.constant dense<0.000000e+00> : vector<16x128xf32>
    %27 = tpu.matmul %25, %26, %cst_14 {dimension_numbers = #tpu.dot_dimension_numbers<[1], [0], [0], [1], [0, 0, 1, 1], [], []>} : vector<16x128xbf16>, vector<128x128xbf16>, vector<16x128xf32> -> vector<16x128xf32>
    %c0_15 = arith.constant 0 : index
    %c0_16 = arith.constant 0 : index
    %28 = vector.load %arg7[%c0_15, %c0_16] : memref<1x128xf32, #tpu.memory_space<vmem>>, vector<1x128xf32>
    %29 = vector.broadcast %28 : vector<1x128xf32> to vector<16x128xf32>
    %30 = arith.addf %27, %29 : vector<16x128xf32>
    %c0_17 = arith.constant 0 : index
    %c0_18 = arith.constant 0 : index
    %31 = vector.load %arg8[%c0_17, %c0_18] : memref<16x128xf32, #tpu.memory_space<vmem>>, vector<16x128xf32>
    tpu.vector_store %arg8[%c0_17, %c0_18], %30 {strides = array<i32>} : memref<16x128xf32, #tpu.memory_space<vmem>>, vector<16x128xf32>,
    return
  }
  func.func @transform_0(%arg0: i32) -> (i32, i32) {
    %c0_i32 = arith.constant 0 : i32
    %c0_i32_0 = arith.constant 0 : i32
    return %arg0, %c0_i32 : i32, i32
  }
  func.func @transform_1(%arg0: i32) -> (i32, i32) {
    %c0_i32 = arith.constant 0 : i32
    %c0_i32_0 = arith.constant 0 : i32
    %c0_i32_1 = arith.constant 0 : i32
    return %c0_i32, %c0_i32_0 : i32, i32
  }
  func.func @transform_2(%arg0: i32) -> (i32, i32) {
    %c0_i32 = arith.constant 0 : i32
    %c0_i32_0 = arith.constant 0 : i32
    %c0_i32_1 = arith.constant 0 : i32
    return %c0_i32, %c0_i32_0 : i32, i32
  }
  func.func @transform_3(%arg0: i32) -> (i32, i32) {
    %c0_i32 = arith.constant 0 : i32
    %c0_i32_0 = arith.constant 0 : i32
    %c0_i32_1 = arith.constant 0 : i32
    return %c0_i32, %c0_i32_0 : i32, i32
  }
  func.func @transform_4(%arg0: i32) -> (i32, i32) {
    %c0_i32 = arith.constant 0 : i32
    %c0_i32_0 = arith.constant 0 : i32
    %c0_i32_1 = arith.constant 0 : i32
    return %c0_i32, %c0_i32_0 : i32, i32
  }
  func.func @transform_5(%arg0: i32) -> (i32, i32) {
    %c0_i32 = arith.constant 0 : i32
    %c0_i32_0 = arith.constant 0 : i32
    %c0_i32_1 = arith.constant 0 : i32
    return %c0_i32, %c0_i32_0 : i32, i32
  }
  func.func @transform_6(%arg0: i32) -> (i32, i32) {
    %c0_i32 = arith.constant 0 : i32
    %c0_i32_0 = arith.constant 0 : i32
    %c0_i32_1 = arith.constant 0 : i32
    return %c0_i32, %c0_i32_0 : i32, i32
  }
  func.func @transform_7(%arg0: i32) -> (i32, i32) {
    %c0_i32 = arith.constant 0 : i32
    %c0_i32_0 = arith.constant 0 : i32
    return %arg0, %c0_i32 : i32, i32
  }
}

module attributes {stable_mosaic.version = 11 : i64} {
  func.func @_fused_mlp_kernel(%arg0: i32, %arg1: memref<16x128xf32, #tpu.memory_space<vmem>>, %arg2: memref<128x128xbf16, #tpu.memory_space<vmem>>, %arg3: memref<1x128xf32, #tpu.memory_space<vmem>>, %arg4: memref<128x128xbf16, #tpu.memory_space<vmem>>, %arg5: memref<1x128xf32, #tpu.memory_space<vmem>>, %arg6: memref<128x128xbf16, #tpu.memory_space<vmem>>, %arg7: memref<1x128xf32, #tpu.memory_space<vmem>>, %arg8: memref<16x128xf32, #tpu.memory_space<vmem>>) attributes {dimension_semantics = [#tpu.dimension_semantics<parallel>], iteration_bounds = array<i64: 2>, scalar_prefetch = 0 : i64, scratch_operands = 0 : i64, tpu.core_type = #tpu.core_type<tc>, window_params = [{transform_indices = @transform_0, window_bounds = array<i64: 16, 128>}, {pipeline_mode = #tpu.pipeline_mode<synchronous>, transform_indices = @transform_1, window_bounds = array<i64: 128, 128>}, {pipeline_mode = #tpu.pipeline_mode<synchronous>, transform_indices = @transform_2, window_bounds = array<i64: 1, 128>}, {pipeline_mode = #tpu.pipeline_mode<synchronous>, transform_indices = @transform_3, window_bounds = array<i64: 128, 128>}, {pipeline_mode = #tpu.pipeline_mode<synchronous>, transform_indices = @transform_4, window_bounds = array<i64: 1, 128>}, {pipeline_mode = #tpu.pipeline_mode<synchronous>, transform_indices = @transform_5, window_bounds = array<i64: 128, 128>}, {pipeline_mode = #tpu.pipeline_mode<synchronous>, transform_indices = @transform_6, window_bounds = array<i64: 1, 128>}, {transform_indices = @transform_7, window_bounds = array<i64: 16, 128>}]} {
    %c0 = arith.constant 0 : index
    %c0_0 = arith.constant 0 : index
    %0 = vector.load %arg1[%c0, %c0_0] : memref<16x128xf32, #tpu.memory_space<vmem>>, vector<16x128xf32>
    %1 = arith.truncf %0 : vector<16x128xf32> to vector<16x128xbf16>
    %c0_1 = arith.constant 0 : index
    %c0_2 = arith.constant 0 : index
    %2 = vector.load %arg2[%c0_1, %c0_2] : memref<128x128xbf16, #tpu.memory_space<vmem>>, vector<128x128xbf16>
    %cst = arith.constant dense<0.000000e+00> : vector<16x128xf32>
    %3 = tpu.matmul %1, %2, %cst {dimension_numbers = #tpu.dot_dimension_numbers<[1], [0], [0], [1], [0, 0, 1, 1], [], []>} : vector<16x128xbf16>, vector<128x128xbf16>, vector<16x128xf32> -> vector<16x128xf32>
    %c0_3 = arith.constant 0 : index
    %c0_4 = arith.constant 0 : index
    %4 = vector.load %arg3[%c0_3, %c0_4] : memref<1x128xf32, #tpu.memory_space<vmem>>, vector<1x128xf32>
    %5 = vector.broadcast %4 : vector<1x128xf32> to vector<16x128xf32>
    %6 = arith.addf %3, %5 : vector<16x128xf32>
    %7 = arith.negf %6 : vector<16x128xf32>
    %8 = math.exp %7 : vector<16x128xf32>
    %cst_5 = arith.constant 1.000000e+00 : f32
    %9 = vector.broadcast %cst_5 : f32 to vector<16x128xf32>
    %10 = arith.addf %9, %8 : vector<16x128xf32>
    %11 = arith.divf %9, %10 : vector<16x128xf32>
    %12 = arith.mulf %6, %11 : vector<16x128xf32>
    %13 = arith.truncf %12 : vector<16x128xf32> to vector<16x128xbf16>
    %c0_6 = arith.constant 0 : index
    %c0_7 = arith.constant 0 : index
    %14 = vector.load %arg4[%c0_6, %c0_7] : memref<128x128xbf16, #tpu.memory_space<vmem>>, vector<128x128xbf16>
    %cst_8 = arith.constant dense<0.000000e+00> : vector<16x128xf32>
    %15 = tpu.matmul %13, %14, %cst_8 {dimension_numbers = #tpu.dot_dimension_numbers<[1], [0], [0], [1], [0, 0, 1, 1], [], []>} : vector<16x128xbf16>, vector<128x128xbf16>, vector<16x128xf32> -> vector<16x128xf32>
    %c0_9 = arith.constant 0 : index
    %c0_10 = arith.constant 0 : index
    %16 = vector.load %arg5[%c0_9, %c0_10] : memref<1x128xf32, #tpu.memory_space<vmem>>, vector<1x128xf32>
    %17 = vector.broadcast %16 : vector<1x128xf32> to vector<16x128xf32>
    %18 = arith.addf %15, %17 : vector<16x128xf32>
    %19 = arith.negf %18 : vector<16x128xf32>
    %20 = math.exp %19 : vector<16x128xf32>
    %cst_11 = arith.constant 1.000000e+00 : f32
    %21 = vector.broadcast %cst_11 : f32 to vector<16x128xf32>
    %22 = arith.addf %21, %20 : vector<16x128xf32>
    %23 = arith.divf %21, %22 : vector<16x128xf32>
    %24 = arith.mulf %18, %23 : vector<16x128xf32>
    %25 = arith.truncf %24 : vector<16x128xf32> to vector<16x128xbf16>
    %c0_12 = arith.constant 0 : index
    %c0_13 = arith.constant 0 : index
    %26 = vector.load %arg6[%c0_12, %c0_13] : memref<128x128xbf16, #tpu.memory_space<vmem>>, vector<128x128xbf16>
    %cst_14 = arith.constant dense<0.000000e+00> : vector<16x128xf32>
    %27 = tpu.matmul %25, %26, %cst_14 {dimension_numbers = #tpu.dot_dimension_numbers<[1], [0], [0], [1], [0, 0, 1, 1], [], []>} : vector<16x128xbf16>, vector<128x128xbf16>, vector<16x128xf32> -> vector<16x128xf32>
    %c0_15 = arith.constant 0 : index
    %c0_16 = arith.constant 0 : index
    %28 = vector.load %arg7[%c0_15, %c0_16] : memref<1x128xf32, #tpu.memory_space<vmem>>, vector<1x128xf32>
    %29 = vector.broadcast %28 : vector<1x128xf32> to vector<16x128xf32>
    %30 = arith.addf %27, %29 : vector<16x128xf32>
    %c0_17 = arith.constant 0 : index
    %c0_18 = arith.constant 0 : index
    %31 = vector.load %arg8[%c0_17, %c0_18] : memref<16x128xf32, #tpu.memory_space<vmem>>, vector<16x128xf32>
    tpu.vector_store %arg8[%c0_17, %c0_18], %30 {strides = array<i32>} : memref<16x128xf32, #tpu.memory_space<vmem>>, vector<16x128xf32>,
    return
  }
  func.func @transform_0(%arg0: i32) -> (i32, i32) {
    %c0_i32 = arith.constant 0 : i32
    %c0_i32_0 = arith.constant 0 : i32
    return %arg0, %c0_i32 : i32, i32
  }
  func.func @transform_1(%arg0: i32) -> (i32, i32) {
    %c0_i32 = arith.constant 0 : i32
    %c0_i32_0 = arith.constant 0 : i32
    %c0_i32_1 = arith.constant 0 : i32
    return %c0_i32, %c0_i32_0 : i32, i32
  }
  func.func @transform_2(%arg0: i32) -> (i32, i32) {
    %c0_i32 = arith.constant 0 : i32
    %c0_i32_0 = arith.constant 0 : i32
    %c0_i32_1 = arith.constant 0 : i32
    return %c0_i32, %c0_i32_0 : i32, i32
  }
  func.func @transform_3(%arg0: i32) -> (i32, i32) {
    %c0_i32 = arith.constant 0 : i32
    %c0_i32_0 = arith.constant 0 : i32
    %c0_i32_1 = arith.constant 0 : i32
    return %c0_i32, %c0_i32_0 : i32, i32
  }
  func.func @transform_4(%arg0: i32) -> (i32, i32) {
    %c0_i32 = arith.constant 0 : i32
    %c0_i32_0 = arith.constant 0 : i32
    %c0_i32_1 = arith.constant 0 : i32
    return %c0_i32, %c0_i32_0 : i32, i32
  }
  func.func @transform_5(%arg0: i32) -> (i32, i32) {
    %c0_i32 = arith.constant 0 : i32
    %c0_i32_0 = arith.constant 0 : i32
    %c0_i32_1 = arith.constant 0 : i32
    return %c0_i32, %c0_i32_0 : i32, i32
  }
  func.func @transform_6(%arg0: i32) -> (i32, i32) {
    %c0_i32 = arith.constant 0 : i32
    %c0_i32_0 = arith.constant 0 : i32
    %c0_i32_1 = arith.constant 0 : i32
    return %c0_i32, %c0_i32_0 : i32, i32
  }
  func.func @transform_7(%arg0: i32) -> (i32, i32) {
    %c0_i32 = arith.constant 0 : i32
    %c0_i32_0 = arith.constant 0 : i32
    return %arg0, %c0_i32 : i32, i32
  }
}

</mosaic_0001>

<llo_original>
// kernel: tpu_custom_call.1
$region0: #{tpu_custom_call.1}
  #allocation0 [shape = 'u32[]', space=smem, size = 0x4, offset = 0x4, fixed_abs, tag = 'smem constant byte address 0x4 - core index']
  #allocation1 [shape = 'u32[144,128]{1,0:T(1,128)}', space=vmem, size = 0x12000, scoped, tag = 'internal scratch']
  %s0 = inlined_call_operand.hbm [shape: f32[32,128], index: 0, kind: input, shape index: {}]
  %s1 = inlined_call_operand.hbm [shape: bf16[128,128], index: 1, kind: input, shape index: {}]
  %s2 = inlined_call_operand.vmem [shape: f32[1,128], index: 2, kind: input, shape index: {}]
  %s3 = inlined_call_operand.hbm [shape: bf16[128,128], index: 3, kind: input, shape index: {}]
  %s4 = inlined_call_operand.vmem [shape: f32[1,128], index: 4, kind: input, shape index: {}]
  %s5 = inlined_call_operand.hbm [shape: bf16[128,128], index: 5, kind: input, shape index: {}]
  %s6 = inlined_call_operand.vmem [shape: f32[1,128], index: 6, kind: input, shape index: {}]
  %s7 = inlined_call_operand.hbm [shape: f32[32,128], index: 7, kind: output, shape index: {}]
  %s8 = sld [smem:[#allocation0]]
  $region77: #{tpu_custom_call.1} parent=0
    _
  %s10 = ssub.s32 1, %s8
  %s11 = scalar_select 0, %s10, %s8
  $region1: #{tpu_custom_call.1} parent=0
    #allocation2 [shape = 'u8[16384]{0}', space=vmem, size = 0x4000, scoped, tag = 'input window, operand 0']
    #allocation3 [shape = 's32[2]{0}', space=sflag, size = 0x8, scoped, tag = 'scoped memory for tpu_custom_call.1']
    #allocation4 [shape = 's32[2]{0}', space=sflag, size = 0x8, scoped, tag = 'scoped memory for tpu_custom_call.1']
    #allocation5 [shape = 'u8[32768]{0}', space=vmem, size = 0x8000, scoped, tag = 'input window, operand 1, single buffered']
    #allocation6 [shape = 's32[1]{0}', space=sflag, size = 0x4, scoped, tag = 'scoped memory for tpu_custom_call.1']
    #allocation7 [shape = 'u8[32768]{0}', space=vmem, size = 0x8000, scoped, tag = 'input window, operand 3, single buffered']
    #allocation8 [shape = 'u8[32768]{0}', space=vmem, size = 0x8000, scoped, tag = 'input window, operand 5, single buffered']
    #allocation9 [shape = 's32[1]{0}', space=sflag, size = 0x4, scoped, tag = 'scoped memory for tpu_custom_call.1']
    #allocation10 [shape = 'u8[16384]{0}', space=vmem, size = 0x4000, scoped, tag = 'output window, operand 0']
    %12 = vsyncpa [#allocation3], 0
    %s13 = scalar_lea.sflag [#allocation3], 1
    %14 = vsyncpa %s13, 0
    %15 = vsyncpa [#allocation6], 0
    %16 = vsyncpa [#allocation9], 0
    %17 = vsyncpa [#allocation4], 0
    %s18 = scalar_lea.sflag [#allocation4], 1
    %19 = vsyncpa %s18, 0
    loop: start=0, step=1, limit=4
    $region2: #{tpu_custom_call.1} parent=1 // loop_pre_header
      _
    $region3: #{tpu_custom_call.1} parent=1 // loop_header
      %s21 = sphi 0, %s25
      %p22 = scmp.ge.s32.totalorder %s21, 4
      %s31 = sphi 0, %s33
      %s34 = sphi 0, %s31
      %s35 = sphi 0, %s34
      %s51 = sphi 0, %s35
      %s55 = sphi 0, %s55
      %s57 = sphi 0, %s55
      %s58 = sphi 0, %s57
      %s72 = sphi 0, %s58
      %s76 = sphi 0, %s76
      %s78 = sphi 0, %s76
      %s79 = sphi 0, %s78
      %s93 = sphi 0, %s79
      %s97 = sphi 0, %s97
      %s99 = sphi 0, %s97
      %s100 = sphi 0, %s99
      %s114 = sphi 0, %s100
      %s118 = sphi 0, %s118
      %s120 = sphi 0, %s118
      %s121 = sphi 0, %s120
      %s135 = sphi 0, %s121
      %s139 = sphi 0, %s139
      %s141 = sphi 0, %s139
      %s142 = sphi 0, %s141
      %s156 = sphi 0, %s142
      %s160 = sphi 0, %s160
      %s162 = sphi 0, %s160
      %s163 = sphi 0, %s162
      %s177 = sphi 0, %s163
      %s183 = sphi 0, %s185
      %s186 = sphi 0, %s183
      %s187 = sphi 0, %s186
      %s203 = sphi 0, %s187
    $region4: #{tpu_custom_call.1} parent=1 // loop_header_branch
      %24 = sbr.rel (%p22) target = $region8
    $region5: #{tpu_custom_call.1} parent=1 // loop_body
      %s26 = ssub.s32 %s21, 1
      %s27 = ssub.s32 %s21, 2
      %s28 = sadd.s32 %s21, 1
      %s29 = ssub.s32 %s21, %s28
      %p30 = scmp.eq.s32.totalorder %s29, 0
      %s32 = sadd.s32 %s31, 1
      %s33 = scalar_select %p30, %s31, %s32
      %p36 = pneg %p30
      %p37 = scmp.eq.s32.totalorder %s21, 1
      %p38 = por %p36, %p37
      %p39 = scmp.ne.s32.totalorder %s31, %s34
      %p40 = scmp.eq.s32.totalorder %s21, 0
      %p41 = por %p39, %p40
      %p42 = scmp.ne.s32.totalorder %s31, %s34
      %p43 = scmp.eq.s32.totalorder %s26, 1
      %p44 = por %p42, %p43
      %p45 = scmp.ne.s32.totalorder %s34, %s35
      %p46 = scmp.eq.s32.totalorder %s26, 0
      %p47 = por %p45, %p46
      %p48 = scmp.ne.s32.totalorder %s34, %s35
      %p49 = scmp.eq.s32.totalorder %s27, 1
      %p50 = por %p48, %p49
      %p52 = scmp.ne.s32.totalorder %s35, %s51
      %p53 = scmp.eq.s32.totalorder %s27, 0
      %p54 = por %p52, %p53
      %s56 = sadd.s32 %s55, 1
      %p59 = scmp.eq.s32.totalorder %s21, 1
      %p60 = scmp.ne.s32.totalorder %s55, %s57
      %p61 = scmp.eq.s32.totalorder %s21, 0
      %p62 = por %p60, %p61
      %p63 = scmp.ne.s32.totalorder %s55, %s57
      %p64 = scmp.eq.s32.totalorder %s26, 1
      %p65 = por %p63, %p64
      %p66 = scmp.ne.s32.totalorder %s57, %s58
      %p67 = scmp.eq.s32.totalorder %s26, 0
      %p68 = por %p66, %p67
      %p69 = scmp.ne.s32.totalorder %s57, %s58
      %p70 = scmp.eq.s32.totalorder %s27, 1
      %p71 = por %p69, %p70
      %p73 = scmp.ne.s32.totalorder %s58, %s72
      %p74 = scmp.eq.s32.totalorder %s27, 0
      %p75 = por %p73, %p74
      %s77 = sadd.s32 %s76, 1
      %p80 = scmp.eq.s32.totalorder %s21, 1
      %p81 = scmp.ne.s32.totalorder %s76, %s78
      %p82 = scmp.eq.s32.totalorder %s21, 0
      %p83 = por %p81, %p82
      %p84 = scmp.ne.s32.totalorder %s76, %s78
      %p85 = scmp.eq.s32.totalorder %s26, 1
      %p86 = por %p84, %p85
      %p87 = scmp.ne.s32.totalorder %s78, %s79
      %p88 = scmp.eq.s32.totalorder %s26, 0
      %p89 = por %p87, %p88
      %p90 = scmp.ne.s32.totalorder %s78, %s79
      %p91 = scmp.eq.s32.totalorder %s27, 1
      %p92 = por %p90, %p91
      %p94 = scmp.ne.s32.totalorder %s79, %s93
      %p95 = scmp.eq.s32.totalorder %s27, 0
      %p96 = por %p94, %p95
      %s98 = sadd.s32 %s97, 1
      %p101 = scmp.eq.s32.totalorder %s21, 1
      %p102 = scmp.ne.s32.totalorder %s97, %s99
      %p103 = scmp.eq.s32.totalorder %s21, 0
      %p104 = por %p102, %p103
      %p105 = scmp.ne.s32.totalorder %s97, %s99
      %p106 = scmp.eq.s32.totalorder %s26, 1
      %p107 = por %p105, %p106
      %p108 = scmp.ne.s32.totalorder %s99, %s100
      %p109 = scmp.eq.s32.totalorder %s26, 0
      %p110 = por %p108, %p109
      %p111 = scmp.ne.s32.totalorder %s99, %s100
      %p112 = scmp.eq.s32.totalorder %s27, 1
      %p113 = por %p111, %p112
      %p115 = scmp.ne.s32.totalorder %s100, %s114
      %p116 = scmp.eq.s32.totalorder %s27, 0
      %p117 = por %p115, %p116
      %s119 = sadd.s32 %s118, 1
      %p122 = scmp.eq.s32.totalorder %s21, 1
      %p123 = scmp.ne.s32.totalorder %s118, %s120
      %p124 = scmp.eq.s32.totalorder %s21, 0
      %p125 = por %p123, %p124
      %p126 = scmp.ne.s32.totalorder %s118, %s120
      %p127 = scmp.eq.s32.totalorder %s26, 1
      %p128 = por %p126, %p127
      %p129 = scmp.ne.s32.totalorder %s120, %s121
      %p130 = scmp.eq.s32.totalorder %s26, 0
      %p131 = por %p129, %p130
      %p132 = scmp.ne.s32.totalorder %s120, %s121
      %p133 = scmp.eq.s32.totalorder %s27, 1
      %p134 = por %p132, %p133
      %p136 = scmp.ne.s32.totalorder %s121, %s135
      %p137 = scmp.eq.s32.totalorder %s27, 0
      %p138 = por %p136, %p137
      %s140 = sadd.s32 %s139, 1
      %p143 = scmp.eq.s32.totalorder %s21, 1
      %p144 = scmp.ne.s32.totalorder %s139, %s141
      %p145 = scmp.eq.s32.totalorder %s21, 0
      %p146 = por %p144, %p145
      %p147 = scmp.ne.s32.totalorder %s139, %s141
      %p148 = scmp.eq.s32.totalorder %s26, 1
      %p149 = por %p147, %p148
      %p150 = scmp.ne.s32.totalorder %s141, %s142
      %p151 = scmp.eq.s32.totalorder %s26, 0
      %p152 = por %p150, %p151
      %p153 = scmp.ne.s32.totalorder %s141, %s142
      %p154 = scmp.eq.s32.totalorder %s27, 1
      %p155 = por %p153, %p154
      %p157 = scmp.ne.s32.totalorder %s142, %s156
      %p158 = scmp.eq.s32.totalorder %s27, 0
      %p159 = por %p157, %p158
      %s161 = sadd.s32 %s160, 1
      %p164 = scmp.eq.s32.totalorder %s21, 1
      %p165 = scmp.ne.s32.totalorder %s160, %s162
      %p166 = scmp.eq.s32.totalorder %s21, 0
      %p167 = por %p165, %p166
      %p168 = scmp.ne.s32.totalorder %s160, %s162
      %p169 = scmp.eq.s32.totalorder %s26, 1
      %p170 = por %p168, %p169
      %p171 = scmp.ne.s32.totalorder %s162, %s163
      %p172 = scmp.eq.s32.totalorder %s26, 0
      %p173 = por %p171, %p172
      %p174 = scmp.ne.s32.totalorder %s162, %s163
      %p175 = scmp.eq.s32.totalorder %s27, 1
      %p176 = por %p174, %p175
      %p178 = scmp.ne.s32.totalorder %s163, %s177
      %p179 = scmp.eq.s32.totalorder %s27, 0
      %p180 = por %p178, %p179
      %s181 = ssub.s32 %s21, %s28
      %p182 = scmp.eq.s32.totalorder %s181, 0
      %s184 = sadd.s32 %s183, 1
      %s185 = scalar_select %p182, %s183, %s184
      %p188 = pneg %p182
      %p189 = scmp.eq.s32.totalorder %s21, 1
      %p190 = por %p188, %p189
      %p191 = scmp.ne.s32.totalorder %s183, %s186
      %p192 = scmp.eq.s32.totalorder %s21, 0
      %p193 = por %p191, %p192
      %p194 = scmp.ne.s32.totalorder %s183, %s186
      %p195 = scmp.eq.s32.totalorder %s26, 1
      %p196 = por %p194, %p195
      %p197 = scmp.ne.s32.totalorder %s186, %s187
      %p198 = scmp.eq.s32.totalorder %s26, 0
      %p199 = por %p197, %p198
      %p200 = scmp.ne.s32.totalorder %s186, %s187
      %p201 = scmp.eq.s32.totalorder %s27, 1
      %p202 = por %p200, %p201
      %p204 = scmp.ne.s32.totalorder %s187, %s203
      %p205 = scmp.eq.s32.totalorder %s27, 0
      %p206 = por %p204, %p205
      %p207 = scmp.le.s32.totalorder 1, %s21
      %p208 = scmp.lt.s32.totalorder %s21, 3
      %p209 = pnand %p207, %p208
      %p210 = pneg %p209
      // Predicated region
      $region9: #{tpu_custom_call.1} parent=5 // pred_check
        _
      $region10: #{tpu_custom_call.1} parent=5 // pred_check_branch
        %212 = sbr.rel (%p209) target = $region12
      $region11: #{tpu_custom_call.1} parent=5 // pred_region
        %s213 = ssub.s32 %s21, 1
        // Predicated region
        $region13: #{tpu_custom_call.1} parent=11 // pred_check
          %p214 = pneg %p68
        $region14: #{tpu_custom_call.1} parent=11 // pred_check_branch
          %216 = sbr.rel (%p214) target = $region16
        $region15: #{tpu_custom_call.1} parent=11 // pred_region
          %s218 = ssub.s32 1024, 1024
          %219 = vsyncadd [#allocation6], %s218
          %s220 = sshll.u32 [#allocation5], 4
          %s221 = int_to_ptr.vmem [resolvable:$true] %s220
          %226 = dma.hbm_to_vmem [thread:$0]  %s1, 1024, %s221, [#allocation6], 64, 64, 4
        $region16: #{tpu_custom_call.1} parent=11 // pred_fallthru
          _
        // Predicated region
        $region17: #{tpu_custom_call.1} parent=11 // pred_check
          %p227 = pneg %p89
        $region18: #{tpu_custom_call.1} parent=11 // pred_check_branch
          %229 = sbr.rel (%p227) target = $region20
        $region19: #{tpu_custom_call.1} parent=11 // pred_region
          _
        $region20: #{tpu_custom_call.1} parent=11 // pred_fallthru
          _
        // Predicated region
        $region21: #{tpu_custom_call.1} parent=11 // pred_check
          %p230 = pneg %p110
        $region22: #{tpu_custom_call.1} parent=11 // pred_check_branch
          %232 = sbr.rel (%p230) target = $region24
        $region23: #{tpu_custom_call.1} parent=11 // pred_region
          %s234 = ssub.s32 1024, 1024
          %235 = vsyncadd [#allocation6], %s234
          %s236 = sshll.u32 [#allocation7], 4
          %s237 = int_to_ptr.vmem [resolvable:$true] %s236
          %242 = dma.hbm_to_vmem [thread:$0]  %s3, 1024, %s237, [#allocation6], 64, 64, 4
        $region24: #{tpu_custom_call.1} parent=11 // pred_fallthru
          _
        // Predicated region
        $region25: #{tpu_custom_call.1} parent=11 // pred_check
          %p243 = pneg %p131
        $region26: #{tpu_custom_call.1} parent=11 // pred_check_branch
          %245 = sbr.rel (%p243) target = $region28
        $region27: #{tpu_custom_call.1} parent=11 // pred_region
          _
        $region28: #{tpu_custom_call.1} parent=11 // pred_fallthru
          _
        // Predicated region
        $region29: #{tpu_custom_call.1} parent=11 // pred_check
          %p246 = pneg %p152
        $region30: #{tpu_custom_call.1} parent=11 // pred_check_branch
          %248 = sbr.rel (%p246) target = $region32
        $region31: #{tpu_custom_call.1} parent=11 // pred_region
          %s250 = ssub.s32 1024, 1024
          %251 = vsyncadd [#allocation9], %s250
          %s252 = sshll.u32 [#allocation8], 4
          %s253 = int_to_ptr.vmem [resolvable:$true] %s252
          %258 = dma.hbm_to_vmem [thread:$0]  %s5, 1024, %s253, [#allocation9], 64, 64, 4
        $region32: #{tpu_custom_call.1} parent=11 // pred_fallthru
          _
        // Predicated region
        $region33: #{tpu_custom_call.1} parent=11 // pred_check
          %p259 = pneg %p173
        $region34: #{tpu_custom_call.1} parent=11 // pred_check_branch
          %261 = sbr.rel (%p259) target = $region36
        $region35: #{tpu_custom_call.1} parent=11 // pred_region
          _
        $region36: #{tpu_custom_call.1} parent=11 // pred_fallthru
          _
      $region12: #{tpu_custom_call.1} parent=5 // pred_fallthru
        _
      %p262 = scmp.lt.s32.totalorder %s21, 2
      // Predicated region
      $region37: #{tpu_custom_call.1} parent=5 // pred_check
        %p263 = pneg %p262
      $region38: #{tpu_custom_call.1} parent=5 // pred_check_branch
        %265 = sbr.rel (%p263) target = $region40
      $region39: #{tpu_custom_call.1} parent=5 // pred_region
        // Predicated region
        $region41: #{tpu_custom_call.1} parent=39 // pred_check
          %p266 = pneg %p41
        $region42: #{tpu_custom_call.1} parent=39 // pred_check_branch
          %268 = sbr.rel (%p266) target = $region44
        $region43: #{tpu_custom_call.1} parent=39 // pred_region
          %s269 = sand.u32 %s31, 1
          %s270 = scalar_lea.sflag [#allocation3], %s269
          %s271 = sand.u32 %s31, 1
          %s272 = smul.addr %s271, 16
          %s273 = scalar_lea.vmem [#allocation2], %s272
          %s274 = smul.u32 2, %s21
          %s276 = ssub.s32 256, 256
          %277 = vsyncadd %s270, %s276
          %s278 = smul.addr %s274, 128
          %s279 = scalar_lea.hbm %s0, %s278
          %s280 = sshll.u32 %s273, 4
          %s281 = int_to_ptr.vmem [resolvable:$true] %s280
          %286 = dma.hbm_to_vmem [thread:$0]  %s279, 256, %s281, %s270, 128, 128, 8
        $region44: #{tpu_custom_call.1} parent=39 // pred_fallthru
          _
      $region40: #{tpu_custom_call.1} parent=5 // pred_fallthru
        _
      %p287 = scmp.le.s32.totalorder 1, %s21
      %p288 = scmp.lt.s32.totalorder %s21, 3
      %p289 = pnand %p287, %p288
      %p290 = pneg %p289
      // Predicated region
      $region45: #{tpu_custom_call.1} parent=5 // pred_check
        _
      $region46: #{tpu_custom_call.1} parent=5 // pred_check_branch
        %292 = sbr.rel (%p289) target = $region48
      $region47: #{tpu_custom_call.1} parent=5 // pred_region
        %s293 = ssub.s32 %s21, 1
        %s294 = sand.u32 %s34, 1
        %s295 = scalar_lea.sflag [#allocation3], %s294
        %s296 = sand.u32 %s34, 1
        %s297 = smul.addr %s296, 16
        %s298 = scalar_lea.vmem [#allocation2], %s297
        // Predicated region
        $region49: #{tpu_custom_call.1} parent=47 // pred_check
          %p299 = pneg %p47
        $region50: #{tpu_custom_call.1} parent=47 // pred_check_branch
          %301 = sbr.rel (%p299) target = $region52
        $region51: #{tpu_custom_call.1} parent=47 // pred_region
          %302 = dma.done %s295, 256
        $region52: #{tpu_custom_call.1} parent=47 // pred_fallthru
          _
        // Predicated region
        $region53: #{tpu_custom_call.1} parent=47 // pred_check
          %p303 = pneg %p68
        $region54: #{tpu_custom_call.1} parent=47 // pred_check_branch
          %305 = sbr.rel (%p303) target = $region56
        $region55: #{tpu_custom_call.1} parent=47 // pred_region
          %306 = dma.done [#allocation6], 1024
        $region56: #{tpu_custom_call.1} parent=47 // pred_fallthru
          _
        // Predicated region
        $region57: #{tpu_custom_call.1} parent=47 // pred_check
          %p307 = pneg %p110
        $region58: #{tpu_custom_call.1} parent=47 // pred_check_branch
          %309 = sbr.rel (%p307) target = $region60
        $region59: #{tpu_custom_call.1} parent=47 // pred_region
          %310 = dma.done [#allocation6], 1024
        $region60: #{tpu_custom_call.1} parent=47 // pred_fallthru
          _
        // Predicated region
        $region61: #{tpu_custom_call.1} parent=47 // pred_check
          %p311 = pneg %p152
        $region62: #{tpu_custom_call.1} parent=47 // pred_check_branch
          %313 = sbr.rel (%p311) target = $region64
        $region63: #{tpu_custom_call.1} parent=47 // pred_region
          %314 = dma.done [#allocation9], 1024
        $region64: #{tpu_custom_call.1} parent=47 // pred_fallthru
          _
        %s315 = sand.u32 %s34, 1
        %s316 = scalar_lea.sflag [#allocation3], %s315
        %s317 = sand.u32 %s34, 1
        %s318 = smul.addr %s317, 16
        %s319 = scalar_lea.vmem [#allocation2], %s318
        %p320 = pneg %p47
        %p321 = pneg %p44
        %p322 = pneg %p68
        %p323 = pneg %p65
        %p324 = pneg %p89
        %p325 = pneg %p86
        %p326 = pneg %p110
        %p327 = pneg %p107
        %p328 = pneg %p131
        %p329 = pneg %p128
        %p330 = pneg %p152
        %p331 = pneg %p149
        %p332 = pneg %p173
        %p333 = pneg %p170
        %p334 = pneg %p199
        %p335 = pneg %p196
        %s336 = sand.u32 %s186, 1
        %s337 = scalar_lea.sflag [#allocation4], %s336
        %s338 = sand.u32 %s186, 1
        %s339 = smul.addr %s338, 16
        %s340 = scalar_lea.vmem [#allocation10], %s339
        %s341 = smul.u32 2, %s26
        %s342 = smul.u32 2, %s26
        %v344 = vld [vmem:[%s298] sm:$0xff]
        %v345 = vld [vmem:[%s298 + $0x8] sm:$0xff]
        %v346 = vpack.c.bf16 %v345, %v344
        %v347 = vld [vmem:[#allocation5] sm:$0xf]
        %v348 = vld [vmem:[#allocation5 + $0x4] sm:$0xf]
        %v349 = vld [vmem:[#allocation5 + $0x8] sm:$0xf]
        %v350 = vld [vmem:[#allocation5 + $0xc] sm:$0xf]
        %v351 = vld [vmem:[#allocation5 + $0x10] sm:$0xf]
        %v352 = vld [vmem:[#allocation5 + $0x14] sm:$0xf]
        %v353 = vld [vmem:[#allocation5 + $0x18] sm:$0xf]
        %v354 = vld [vmem:[#allocation5 + $0x1c] sm:$0xf]
        %v355 = vld [vmem:[#allocation5 + $0x20] sm:$0xf]
        %v356 = vld [vmem:[#allocation5 + $0x24] sm:$0xf]
        %v357 = vld [vmem:[#allocation5 + $0x28] sm:$0xf]
        %v358 = vld [vmem:[#allocation5 + $0x2c] sm:$0xf]
        %v359 = vld [vmem:[#allocation5 + $0x30] sm:$0xf]
        %v360 = vld [vmem:[#allocation5 + $0x34] sm:$0xf]
        %v361 = vld [vmem:[#allocation5 + $0x38] sm:$0xf]
        %v362 = vld [vmem:[#allocation5 + $0x3c] sm:$0xf]
        %v363 = vld [vmem:[%s2] sm:$0x1]
        %v365 = vlaneseq
        %v366 = vshrl.u32 %v365, 7
        %v367 = vsub.s32 0, %v366
        %v368 = vrot.slane %v363, %v367
        %v386 = vunpack.c.l.b16 %v347
        %v387 = vunpack.c.l.b16 %v348
        %v388 = vunpack.c.l.b16 %v349
        %v389 = vunpack.c.l.b16 %v350
        %v390 = vunpack.c.l.b16 %v351
        %v391 = vunpack.c.l.b16 %v352
        %v392 = vunpack.c.l.b16 %v353
        %v393 = vunpack.c.l.b16 %v354
        %v394 = vunpack.c.l.b16 %v355
        %v395 = vunpack.c.l.b16 %v356
        %v396 = vunpack.c.l.b16 %v357
        %v397 = vunpack.c.l.b16 %v358
        %v398 = vunpack.c.l.b16 %v359
        %v399 = vunpack.c.l.b16 %v360
        %v400 = vunpack.c.l.b16 %v361
        %v401 = vunpack.c.l.b16 %v362
        %v402 = vpack.c.b16 %v387, %v386
        %v403 = vpack.c.b16 %v389, %v388
        %v404 = vpack.c.b16 %v391, %v390
        %v405 = vpack.c.b16 %v393, %v392
        %v406 = vpack.c.b16 %v395, %v394
        %v407 = vpack.c.b16 %v397, %v396
        %v408 = vpack.c.b16 %v399, %v398
        %v409 = vpack.c.b16 %v401, %v400
        %418 = vmatprep.subr.bf16.mxu0 0
        %419 = vmatpush1.bf16.msra.mxu0 %v409
        %420 = vmatprep.subr.bf16.mxu0 0
        %421 = vmatpush1.bf16.msra.mxu0 %v408
        %422 = vmatprep.subr.bf16.mxu0 0
        %423 = vmatpush1.bf16.msra.mxu0 %v407
        %424 = vmatprep.subr.bf16.mxu0 0
        %425 = vmatpush1.bf16.msra.mxu0 %v406
        %426 = vmatprep.subr.bf16.mxu0 0
        %427 = vmatpush1.bf16.msra.mxu0 %v405
        %428 = vmatprep.subr.bf16.mxu0 0
        %429 = vmatpush1.bf16.msra.mxu0 %v404
        %430 = vmatprep.subr.bf16.mxu0 0
        %431 = vmatpush1.bf16.msra.mxu0 %v403
        %432 = vmatprep.subr.bf16.mxu0 0
        %433 = vmatpush1.bf16.msra.mxu0 %v402
        %434 = vmatprep.subr.bf16.mxu0 0
        %435 = vmatpush2.bf16.msra.mxu0 0
        %436 = vmatprep.subr.bf16.mxu0 0
        %437 = vmatpush2.bf16.msra.mxu0 0
        %438 = vmatprep.subr.bf16.mxu0 0
        %439 = vmatpush2.bf16.msra.mxu0 0
        %440 = vmatprep.subr.bf16.mxu0 0
        %441 = vmatpush2.bf16.msra.mxu0 0
        %442 = vmatprep.subr.bf16.mxu0 0
        %443 = vmatpush2.bf16.msra.mxu0 0
        %444 = vmatprep.subr.bf16.mxu0 0
        %445 = vmatpush2.bf16.msra.mxu0 0
        %446 = vmatprep.subr.bf16.mxu0 0
        %447 = vmatpush2.bf16.msra.mxu0 0
        %448 = vmatprep.subr.bf16.mxu0 0
        %449 = vmatpush2.bf16.msra.mxu0 0
        %450 = vmatprep.mubr.bf16.mxu0 0
        %451 = vmatmul.mubr.bf16.gmra.mxu0 %v346
        %v452 = vpop.f32.mrf.mxu0
        %v453 = vadd.f32 %v368, %v452
        %v454 = vpop.f32.mrf.mxu0
        %v455 = vpop.f32.mrf.mxu0
        %v456 = vadd.f32 %v368, %v455
        %v457 = vpop.f32.mrf.mxu0
        %458 = vdwg.mxu0
        %v459 = vxor.u32 %v453, 2147483648
        %v460 = vxor.u32 %v456, 2147483648
        %v461 = vmul.f32 %v459, 1.442695
        %v462 = vpow.pop %v461
        %v463 = vmul.f32 %v460, 1.442695
        %v464 = vpow.pop %v463
        %v465 = vadd.f32 %v462, 1.0
        %v466 = vadd.f32 %v464, 1.0
        %v467 = vrcp.pop %v465
        %v468 = vmul.f32 1.0, %v467
        %v469 = vrcp.pop %v466
        %v470 = vmul.f32 1.0, %v469
        %v471 = vmul.f32 %v453, %v468
        %v472 = vmul.f32 %v456, %v470
        %v473 = vpack.c.bf16 %v472, %v471
        %v474 = vld [vmem:[#allocation7] sm:$0xf]
        %v475 = vld [vmem:[#allocation7 + $0x4] sm:$0xf]
        %v476 = vld [vmem:[#allocation7 + $0x8] sm:$0xf]
        %v477 = vld [vmem:[#allocation7 + $0xc] sm:$0xf]
        %v478 = vld [vmem:[#allocation7 + $0x10] sm:$0xf]
        %v479 = vld [vmem:[#allocation7 + $0x14] sm:$0xf]
        %v480 = vld [vmem:[#allocation7 + $0x18] sm:$0xf]
        %v481 = vld [vmem:[#allocation7 + $0x1c] sm:$0xf]
        %v482 = vld [vmem:[#allocation7 + $0x20] sm:$0xf]
        %v483 = vld [vmem:[#allocation7 + $0x24] sm:$0xf]
        %v484 = vld [vmem:[#allocation7 + $0x28] sm:$0xf]
        %v485 = vld [vmem:[#allocation7 + $0x2c] sm:$0xf]
        %v486 = vld [vmem:[#allocation7 + $0x30] sm:$0xf]
        %v487 = vld [vmem:[#allocation7 + $0x34] sm:$0xf]
        %v488 = vld [vmem:[#allocation7 + $0x38] sm:$0xf]
        %v489 = vld [vmem:[#allocation7 + $0x3c] sm:$0xf]
        %v490 = vld [vmem:[%s4] sm:$0x1]
        %v492 = vlaneseq
        %v493 = vshrl.u32 %v492, 7
        %v494 = vsub.s32 0, %v493
        %v495 = vrot.slane %v490, %v494
        %v513 = vunpack.c.l.b16 %v474
        %v514 = vunpack.c.l.b16 %v475
        %v515 = vunpack.c.l.b16 %v476
        %v516 = vunpack.c.l.b16 %v477
        %v517 = vunpack.c.l.b16 %v478
        %v518 = vunpack.c.l.b16 %v479
        %v519 = vunpack.c.l.b16 %v480
        %v520 = vunpack.c.l.b16 %v481
        %v521 = vunpack.c.l.b16 %v482
        %v522 = vunpack.c.l.b16 %v483
        %v523 = vunpack.c.l.b16 %v484
        %v524 = vunpack.c.l.b16 %v485
        %v525 = vunpack.c.l.b16 %v486
        %v526 = vunpack.c.l.b16 %v487
        %v527 = vunpack.c.l.b16 %v488
        %v528 = vunpack.c.l.b16 %v489
        %v529 = vpack.c.b16 %v514, %v513
        %v530 = vpack.c.b16 %v516, %v515
        %v531 = vpack.c.b16 %v518, %v517
        %v532 = vpack.c.b16 %v520, %v519
        %v533 = vpack.c.b16 %v522, %v521
        %v534 = vpack.c.b16 %v524, %v523
        %v535 = vpack.c.b16 %v526, %v525
        %v536 = vpack.c.b16 %v528, %v527
        %545 = vmatprep.subr.bf16.mxu0 0
        %546 = vmatpush1.bf16.msra.mxu0 %v536
        %547 = vmatprep.subr.bf16.mxu0 0
        %548 = vmatpush1.bf16.msra.mxu0 %v535
        %549 = vmatprep.subr.bf16.mxu0 0
        %550 = vmatpush1.bf16.msra.mxu0 %v534
        %551 = vmatprep.subr.bf16.mxu0 0
        %552 = vmatpush1.bf16.msra.mxu0 %v533
        %553 = vmatprep.subr.bf16.mxu0 0
        %554 = vmatpush1.bf16.msra.mxu0 %v532
        %555 = vmatprep.subr.bf16.mxu0 0
        %556 = vmatpush1.bf16.msra.mxu0 %v531
        %557 = vmatprep.subr.bf16.mxu0 0
        %558 = vmatpush1.bf16.msra.mxu0 %v530
        %559 = vmatprep.subr.bf16.mxu0 0
        %560 = vmatpush1.bf16.msra.mxu0 %v529
        %561 = vmatprep.subr.bf16.mxu0 0
        %562 = vmatpush2.bf16.msra.mxu0 0
        %563 = vmatprep.subr.bf16.mxu0 0
        %564 = vmatpush2.bf16.msra.mxu0 0
        %565 = vmatprep.subr.bf16.mxu0 0
        %566 = vmatpush2.bf16.msra.mxu0 0
        %567 = vmatprep.subr.bf16.mxu0 0
        %568 = vmatpush2.bf16.msra.mxu0 0
        %569 = vmatprep.subr.bf16.mxu0 0
        %570 = vmatpush2.bf16.msra.mxu0 0
        %571 = vmatprep.subr.bf16.mxu0 0
        %572 = vmatpush2.bf16.msra.mxu0 0
        %573 = vmatprep.subr.bf16.mxu0 0
        %574 = vmatpush2.bf16.msra.mxu0 0
        %575 = vmatprep.subr.bf16.mxu0 0
        %576 = vmatpush2.bf16.msra.mxu0 0
        %577 = vmatprep.mubr.bf16.mxu0 0
        %578 = vmatmul.mubr.bf16.gmra.mxu0 %v473
        %v579 = vpop.f32.mrf.mxu0
        %v580 = vadd.f32 %v495, %v579
        %v581 = vpop.f32.mrf.mxu0
        %v582 = vpop.f32.mrf.mxu0
        %v583 = vadd.f32 %v495, %v582
        %v584 = vpop.f32.mrf.mxu0
        %585 = vdwg.mxu0
        %v586 = vxor.u32 %v580, 2147483648
        %v587 = vxor.u32 %v583, 2147483648
        %v588 = vmul.f32 %v586, 1.442695
        %v589 = vpow.pop %v588
        %v590 = vmul.f32 %v587, 1.442695
        %v591 = vpow.pop %v590
        %v592 = vadd.f32 %v589, 1.0
        %v593 = vadd.f32 %v591, 1.0
        %v594 = vrcp.pop %v592
        %v595 = vmul.f32 1.0, %v594
        %v596 = vrcp.pop %v593
        %v597 = vmul.f32 1.0, %v596
        %v598 = vmul.f32 %v580, %v595
        %v599 = vmul.f32 %v583, %v597
        %v600 = vpack.c.bf16 %v599, %v598
        %v601 = vld [vmem:[#allocation8] sm:$0xf]
        %v602 = vld [vmem:[#allocation8 + $0x4] sm:$0xf]
        %v603 = vld [vmem:[#allocation8 + $0x8] sm:$0xf]
        %v604 = vld [vmem:[#allocation8 + $0xc] sm:$0xf]
        %v605 = vld [vmem:[#allocation8 + $0x10] sm:$0xf]
        %v606 = vld [vmem:[#allocation8 + $0x14] sm:$0xf]
        %v607 = vld [vmem:[#allocation8 + $0x18] sm:$0xf]
        %v608 = vld [vmem:[#allocation8 + $0x1c] sm:$0xf]
        %v609 = vld [vmem:[#allocation8 + $0x20] sm:$0xf]
        %v610 = vld [vmem:[#allocation8 + $0x24] sm:$0xf]
        %v611 = vld [vmem:[#allocation8 + $0x28] sm:$0xf]
        %v612 = vld [vmem:[#allocation8 + $0x2c] sm:$0xf]
        %v613 = vld [vmem:[#allocation8 + $0x30] sm:$0xf]
        %v614 = vld [vmem:[#allocation8 + $0x34] sm:$0xf]
        %v615 = vld [vmem:[#allocation8 + $0x38] sm:$0xf]
        %v616 = vld [vmem:[#allocation8 + $0x3c] sm:$0xf]
        %v617 = vld [vmem:[%s6] sm:$0x1]
        %v619 = vlaneseq
        %v620 = vshrl.u32 %v619, 7
        %v621 = vsub.s32 0, %v620
        %v622 = vrot.slane %v617, %v621
        %v640 = vunpack.c.l.b16 %v601
        %v641 = vunpack.c.l.b16 %v602
        %v642 = vunpack.c.l.b16 %v603
        %v643 = vunpack.c.l.b16 %v604
        %v644 = vunpack.c.l.b16 %v605
        %v645 = vunpack.c.l.b16 %v606
        %v646 = vunpack.c.l.b16 %v607
        %v647 = vunpack.c.l.b16 %v608
        %v648 = vunpack.c.l.b16 %v609
        %v649 = vunpack.c.l.b16 %v610
        %v650 = vunpack.c.l.b16 %v611
        %v651 = vunpack.c.l.b16 %v612
        %v652 = vunpack.c.l.b16 %v613
        %v653 = vunpack.c.l.b16 %v614
        %v654 = vunpack.c.l.b16 %v615
        %v655 = vunpack.c.l.b16 %v616
        %v656 = vpack.c.b16 %v641, %v640
        %v657 = vpack.c.b16 %v643, %v642
        %v658 = vpack.c.b16 %v645, %v644
        %v659 = vpack.c.b16 %v647, %v646
        %v660 = vpack.c.b16 %v649, %v648
        %v661 = vpack.c.b16 %v651, %v650
        %v662 = vpack.c.b16 %v653, %v652
        %v663 = vpack.c.b16 %v655, %v654
        %672 = vmatprep.subr.bf16.mxu0 0
        %673 = vmatpush1.bf16.msra.mxu0 %v663
        %674 = vmatprep.subr.bf16.mxu0 0
        %675 = vmatpush1.bf16.msra.mxu0 %v662
        %676 = vmatprep.subr.bf16.mxu0 0
        %677 = vmatpush1.bf16.msra.mxu0 %v661
        %678 = vmatprep.subr.bf16.mxu0 0
        %679 = vmatpush1.bf16.msra.mxu0 %v660
        %680 = vmatprep.subr.bf16.mxu0 0
        %681 = vmatpush1.bf16.msra.mxu0 %v659
        %682 = vmatprep.subr.bf16.mxu0 0
        %683 = vmatpush1.bf16.msra.mxu0 %v658
        %684 = vmatprep.subr.bf16.mxu0 0
        %685 = vmatpush1.bf16.msra.mxu0 %v657
        %686 = vmatprep.subr.bf16.mxu0 0
        %687 = vmatpush1.bf16.msra.mxu0 %v656
        %688 = vmatprep.subr.bf16.mxu0 0
        %689 = vmatpush2.bf16.msra.mxu0 0
        %690 = vmatprep.subr.bf16.mxu0 0
        %691 = vmatpush2.bf16.msra.mxu0 0
        %692 = vmatprep.subr.bf16.mxu0 0
        %693 = vmatpush2.bf16.msra.mxu0 0
        %694 = vmatprep.subr.bf16.mxu0 0
        %695 = vmatpush2.bf16.msra.mxu0 0
        %696 = vmatprep.subr.bf16.mxu0 0
        %697 = vmatpush2.bf16.msra.mxu0 0
        %698 = vmatprep.subr.bf16.mxu0 0
        %699 = vmatpush2.bf16.msra.mxu0 0
        %700 = vmatprep.subr.bf16.mxu0 0
        %701 = vmatpush2.bf16.msra.mxu0 0
        %702 = vmatprep.subr.bf16.mxu0 0
        %703 = vmatpush2.bf16.msra.mxu0 0
        %704 = vmatprep.mubr.bf16.mxu0 0
        %705 = vmatmul.mubr.bf16.gmra.mxu0 %v600
        %v706 = vpop.f32.mrf.mxu0
        %v707 = vadd.f32 %v622, %v706
        %v708 = vpop.f32.mrf.mxu0
        %v709 = vpop.f32.mrf.mxu0
        %v710 = vadd.f32 %v622, %v709
        %v711 = vpop.f32.mrf.mxu0
        %712 = vdwg.mxu0
        %713 = vst [vmem:[%s340] sm:$0xff] %v707
        %714 = vst [vmem:[%s340 + $0x8] sm:$0xff] %v710
        %s715 = sand.u32 %s186, 1
        %s716 = scalar_lea.sflag [#allocation4], %s715
        %s717 = sand.u32 %s186, 1
        %s718 = smul.addr %s717, 16
        %s719 = scalar_lea.vmem [#allocation10], %s718
        // Predicated region
        $region65: #{tpu_custom_call.1} parent=47 // pred_check
          %p720 = pneg %p196
        $region66: #{tpu_custom_call.1} parent=47 // pred_check_branch
          %722 = sbr.rel (%p720) target = $region68
        $region67: #{tpu_custom_call.1} parent=47 // pred_region
          %s723 = smul.u32 2, %s26
          %s725 = ssub.s32 256, 256
          %726 = vsyncadd %s716, %s725
          %s727 = smul.addr %s723, 128
          %s728 = scalar_lea.hbm %s7, %s727
          %s729 = sshll.u32 %s719, 4
          %s730 = int_to_ptr.vmem [resolvable:$true] %s729
          %735 = dma.vmem_to_hbm [thread:$0]  %s730, 256, %s728, %s716, 128, 128, 8
        $region68: #{tpu_custom_call.1} parent=47 // pred_fallthru
          _
      $region48: #{tpu_custom_call.1} parent=5 // pred_fallthru
        _
      %p736 = scmp.le.s32.totalorder 2, %s21
      // Predicated region
      $region69: #{tpu_custom_call.1} parent=5 // pred_check
        %p737 = pneg %p736
      $region70: #{tpu_custom_call.1} parent=5 // pred_check_branch
        %739 = sbr.rel (%p737) target = $region72
      $region71: #{tpu_custom_call.1} parent=5 // pred_region
        %s740 = ssub.s32 %s21, 2
        // Predicated region
        $region73: #{tpu_custom_call.1} parent=71 // pred_check
          %p741 = pneg %p202
        $region74: #{tpu_custom_call.1} parent=71 // pred_check_branch
          %743 = sbr.rel (%p741) target = $region76
        $region75: #{tpu_custom_call.1} parent=71 // pred_region
          %s744 = sand.u32 %s187, 1
          %s745 = scalar_lea.sflag [#allocation4], %s744
          %s746 = sand.u32 %s187, 1
          %s747 = smul.addr %s746, 16
          %s748 = scalar_lea.vmem [#allocation10], %s747
          %749 = dma.done %s745, 256
        $region76: #{tpu_custom_call.1} parent=71 // pred_fallthru
          _
      $region72: #{tpu_custom_call.1} parent=5 // pred_fallthru
        _
    $region6: #{tpu_custom_call.1} parent=1 // loop_footer
      %s25 = sadd.s32 1, %s21
    $region7: #{tpu_custom_call.1} parent=1 // loop_footer_branch
      %20 = sbr.rel target = $region3
    $region8: #{tpu_custom_call.1} parent=1 // loop_exit
      _
    %750 = vsyncpa [#allocation3], 1
    %s751 = scalar_lea.sflag [#allocation3], 1
    %752 = vsyncpa %s751, 1
    %753 = vsyncpa [#allocation6], 1
    %754 = vsyncpa [#allocation9], 1
    %755 = vsyncpa [#allocation4], 1
    %s756 = scalar_lea.sflag [#allocation4], 1
    %757 = vsyncpa %s756, 1

// kernel: tpu_custom_call.1
$region0: #{tpu_custom_call.1}
  #allocation0 [shape = 'u32[]', space=smem, size = 0x4, offset = 0x4, fixed_abs, tag = 'smem constant byte address 0x4 - core index']
  #allocation1 [shape = 'u32[144,128]{1,0:T(1,128)}', space=vmem, size = 0x12000, scoped, tag = 'internal scratch']
  %s0 = inlined_call_operand.hbm [shape: f32[32,128], index: 0, kind: input, shape index: {}]
  %s1 = inlined_call_operand.hbm [shape: bf16[128,128], index: 1, kind: input, shape index: {}]
  %s2 = inlined_call_operand.vmem [shape: f32[1,128], index: 2, kind: input, shape index: {}]
  %s3 = inlined_call_operand.hbm [shape: bf16[128,128], index: 3, kind: input, shape index: {}]
  %s4 = inlined_call_operand.vmem [shape: f32[1,128], index: 4, kind: input, shape index: {}]
  %s5 = inlined_call_operand.hbm [shape: bf16[128,128], index: 5, kind: input, shape index: {}]
  %s6 = inlined_call_operand.vmem [shape: f32[1,128], index: 6, kind: input, shape index: {}]
  %s7 = inlined_call_operand.hbm [shape: f32[32,128], index: 7, kind: output, shape index: {}]
  %s8 = sld [smem:[#allocation0]]
  $region77: #{tpu_custom_call.1} parent=0
    _
  %s10 = ssub.s32 1, %s8
  %s11 = scalar_select 0, %s10, %s8
  $region1: #{tpu_custom_call.1} parent=0
    #allocation2 [shape = 'u8[16384]{0}', space=vmem, size = 0x4000, scoped, tag = 'input window, operand 0']
    #allocation3 [shape = 's32[2]{0}', space=sflag, size = 0x8, scoped, tag = 'scoped memory for tpu_custom_call.1']
    #allocation4 [shape = 's32[2]{0}', space=sflag, size = 0x8, scoped, tag = 'scoped memory for tpu_custom_call.1']
    #allocation5 [shape = 'u8[32768]{0}', space=vmem, size = 0x8000, scoped, tag = 'input window, operand 1, single buffered']
    #allocation6 [shape = 's32[1]{0}', space=sflag, size = 0x4, scoped, tag = 'scoped memory for tpu_custom_call.1']
    #allocation7 [shape = 'u8[32768]{0}', space=vmem, size = 0x8000, scoped, tag = 'input window, operand 3, single buffered']
    #allocation8 [shape = 'u8[32768]{0}', space=vmem, size = 0x8000, scoped, tag = 'input window, operand 5, single buffered']
    #allocation9 [shape = 's32[1]{0}', space=sflag, size = 0x4, scoped, tag = 'scoped memory for tpu_custom_call.1']
    #allocation10 [shape = 'u8[16384]{0}', space=vmem, size = 0x4000, scoped, tag = 'output window, operand 0']
    %12 = vsyncpa [#allocation3], 0
    %s13 = scalar_lea.sflag [#allocation3], 1
    %14 = vsyncpa %s13, 0
    %15 = vsyncpa [#allocation6], 0
    %16 = vsyncpa [#allocation9], 0
    %17 = vsyncpa [#allocation4], 0
    %s18 = scalar_lea.sflag [#allocation4], 1
    %19 = vsyncpa %s18, 0
    loop: start=0, step=1, limit=4
    $region2: #{tpu_custom_call.1} parent=1 // loop_pre_header
      _
    $region3: #{tpu_custom_call.1} parent=1 // loop_header
      %s21 = sphi 0, %s25
      %p22 = scmp.ge.s32.totalorder %s21, 4
      %s31 = sphi 0, %s33
      %s34 = sphi 0, %s31
      %s35 = sphi 0, %s34
      %s51 = sphi 0, %s35
      %s55 = sphi 0, %s55
      %s57 = sphi 0, %s55
      %s58 = sphi 0, %s57
      %s72 = sphi 0, %s58
      %s76 = sphi 0, %s76
      %s78 = sphi 0, %s76
      %s79 = sphi 0, %s78
      %s93 = sphi 0, %s79
      %s97 = sphi 0, %s97
      %s99 = sphi 0, %s97
      %s100 = sphi 0, %s99
      %s114 = sphi 0, %s100
      %s118 = sphi 0, %s118
      %s120 = sphi 0, %s118
      %s121 = sphi 0, %s120
      %s135 = sphi 0, %s121
      %s139 = sphi 0, %s139
      %s141 = sphi 0, %s139
      %s142 = sphi 0, %s141
      %s156 = sphi 0, %s142
      %s160 = sphi 0, %s160
      %s162 = sphi 0, %s160
      %s163 = sphi 0, %s162
      %s177 = sphi 0, %s163
      %s183 = sphi 0, %s185
      %s186 = sphi 0, %s183
      %s187 = sphi 0, %s186
      %s203 = sphi 0, %s187
    $region4: #{tpu_custom_call.1} parent=1 // loop_header_branch
      %24 = sbr.rel (%p22) target = $region8
    $region5: #{tpu_custom_call.1} parent=1 // loop_body
      %s26 = ssub.s32 %s21, 1
      %s27 = ssub.s32 %s21, 2
      %s28 = sadd.s32 %s21, 1
      %s29 = ssub.s32 %s21, %s28
      %p30 = scmp.eq.s32.totalorder %s29, 0
      %s32 = sadd.s32 %s31, 1
      %s33 = scalar_select %p30, %s31, %s32
      %p36 = pneg %p30
      %p37 = scmp.eq.s32.totalorder %s21, 1
      %p38 = por %p36, %p37
      %p39 = scmp.ne.s32.totalorder %s31, %s34
      %p40 = scmp.eq.s32.totalorder %s21, 0
      %p41 = por %p39, %p40
      %p42 = scmp.ne.s32.totalorder %s31, %s34
      %p43 = scmp.eq.s32.totalorder %s26, 1
      %p44 = por %p42, %p43
      %p45 = scmp.ne.s32.totalorder %s34, %s35
      %p46 = scmp.eq.s32.totalorder %s26, 0
      %p47 = por %p45, %p46
      %p48 = scmp.ne.s32.totalorder %s34, %s35
      %p49 = scmp.eq.s32.totalorder %s27, 1
      %p50 = por %p48, %p49
      %p52 = scmp.ne.s32.totalorder %s35, %s51
      %p53 = scmp.eq.s32.totalorder %s27, 0
      %p54 = por %p52, %p53
      %s56 = sadd.s32 %s55, 1
      %p59 = scmp.eq.s32.totalorder %s21, 1
      %p60 = scmp.ne.s32.totalorder %s55, %s57
      %p61 = scmp.eq.s32.totalorder %s21, 0
      %p62 = por %p60, %p61
      %p63 = scmp.ne.s32.totalorder %s55, %s57
      %p64 = scmp.eq.s32.totalorder %s26, 1
      %p65 = por %p63, %p64
      %p66 = scmp.ne.s32.totalorder %s57, %s58
      %p67 = scmp.eq.s32.totalorder %s26, 0
      %p68 = por %p66, %p67
      %p69 = scmp.ne.s32.totalorder %s57, %s58
      %p70 = scmp.eq.s32.totalorder %s27, 1
      %p71 = por %p69, %p70
      %p73 = scmp.ne.s32.totalorder %s58, %s72
      %p74 = scmp.eq.s32.totalorder %s27, 0
      %p75 = por %p73, %p74
      %s77 = sadd.s32 %s76, 1
      %p80 = scmp.eq.s32.totalorder %s21, 1
      %p81 = scmp.ne.s32.totalorder %s76, %s78
      %p82 = scmp.eq.s32.totalorder %s21, 0
      %p83 = por %p81, %p82
      %p84 = scmp.ne.s32.totalorder %s76, %s78
      %p85 = scmp.eq.s32.totalorder %s26, 1
      %p86 = por %p84, %p85
      %p87 = scmp.ne.s32.totalorder %s78, %s79
      %p88 = scmp.eq.s32.totalorder %s26, 0
      %p89 = por %p87, %p88
      %p90 = scmp.ne.s32.totalorder %s78, %s79
      %p91 = scmp.eq.s32.totalorder %s27, 1
      %p92 = por %p90, %p91
      %p94 = scmp.ne.s32.totalorder %s79, %s93
      %p95 = scmp.eq.s32.totalorder %s27, 0
      %p96 = por %p94, %p95
      %s98 = sadd.s32 %s97, 1
      %p101 = scmp.eq.s32.totalorder %s21, 1
      %p102 = scmp.ne.s32.totalorder %s97, %s99
      %p103 = scmp.eq.s32.totalorder %s21, 0
      %p104 = por %p102, %p103
      %p105 = scmp.ne.s32.totalorder %s97, %s99
      %p106 = scmp.eq.s32.totalorder %s26, 1
      %p107 = por %p105, %p106
      %p108 = scmp.ne.s32.totalorder %s99, %s100
      %p109 = scmp.eq.s32.totalorder %s26, 0
      %p110 = por %p108, %p109
      %p111 = scmp.ne.s32.totalorder %s99, %s100
      %p112 = scmp.eq.s32.totalorder %s27, 1
      %p113 = por %p111, %p112
      %p115 = scmp.ne.s32.totalorder %s100, %s114
      %p116 = scmp.eq.s32.totalorder %s27, 0
      %p117 = por %p115, %p116
      %s119 = sadd.s32 %s118, 1
      %p122 = scmp.eq.s32.totalorder %s21, 1
      %p123 = scmp.ne.s32.totalorder %s118, %s120
      %p124 = scmp.eq.s32.totalorder %s21, 0
      %p125 = por %p123, %p124
      %p126 = scmp.ne.s32.totalorder %s118, %s120
      %p127 = scmp.eq.s32.totalorder %s26, 1
      %p128 = por %p126, %p127
      %p129 = scmp.ne.s32.totalorder %s120, %s121
      %p130 = scmp.eq.s32.totalorder %s26, 0
      %p131 = por %p129, %p130
      %p132 = scmp.ne.s32.totalorder %s120, %s121
      %p133 = scmp.eq.s32.totalorder %s27, 1
      %p134 = por %p132, %p133
      %p136 = scmp.ne.s32.totalorder %s121, %s135
      %p137 = scmp.eq.s32.totalorder %s27, 0
      %p138 = por %p136, %p137
      %s140 = sadd.s32 %s139, 1
      %p143 = scmp.eq.s32.totalorder %s21, 1
      %p144 = scmp.ne.s32.totalorder %s139, %s141
      %p145 = scmp.eq.s32.totalorder %s21, 0
      %p146 = por %p144, %p145
      %p147 = scmp.ne.s32.totalorder %s139, %s141
      %p148 = scmp.eq.s32.totalorder %s26, 1
      %p149 = por %p147, %p148
      %p150 = scmp.ne.s32.totalorder %s141, %s142
      %p151 = scmp.eq.s32.totalorder %s26, 0
      %p152 = por %p150, %p151
      %p153 = scmp.ne.s32.totalorder %s141, %s142
      %p154 = scmp.eq.s32.totalorder %s27, 1
      %p155 = por %p153, %p154
      %p157 = scmp.ne.s32.totalorder %s142, %s156
      %p158 = scmp.eq.s32.totalorder %s27, 0
      %p159 = por %p157, %p158
      %s161 = sadd.s32 %s160, 1
      %p164 = scmp.eq.s32.totalorder %s21, 1
      %p165 = scmp.ne.s32.totalorder %s160, %s162
      %p166 = scmp.eq.s32.totalorder %s21, 0
      %p167 = por %p165, %p166
      %p168 = scmp.ne.s32.totalorder %s160, %s162
      %p169 = scmp.eq.s32.totalorder %s26, 1
      %p170 = por %p168, %p169
      %p171 = scmp.ne.s32.totalorder %s162, %s163
      %p172 = scmp.eq.s32.totalorder %s26, 0
      %p173 = por %p171, %p172
      %p174 = scmp.ne.s32.totalorder %s162, %s163
      %p175 = scmp.eq.s32.totalorder %s27, 1
      %p176 = por %p174, %p175
      %p178 = scmp.ne.s32.totalorder %s163, %s177
      %p179 = scmp.eq.s32.totalorder %s27, 0
      %p180 = por %p178, %p179
      %s181 = ssub.s32 %s21, %s28
      %p182 = scmp.eq.s32.totalorder %s181, 0
      %s184 = sadd.s32 %s183, 1
      %s185 = scalar_select %p182, %s183, %s184
      %p188 = pneg %p182
      %p189 = scmp.eq.s32.totalorder %s21, 1
      %p190 = por %p188, %p189
      %p191 = scmp.ne.s32.totalorder %s183, %s186
      %p192 = scmp.eq.s32.totalorder %s21, 0
      %p193 = por %p191, %p192
      %p194 = scmp.ne.s32.totalorder %s183, %s186
      %p195 = scmp.eq.s32.totalorder %s26, 1
      %p196 = por %p194, %p195
      %p197 = scmp.ne.s32.totalorder %s186, %s187
      %p198 = scmp.eq.s32.totalorder %s26, 0
      %p199 = por %p197, %p198
      %p200 = scmp.ne.s32.totalorder %s186, %s187
      %p201 = scmp.eq.s32.totalorder %s27, 1
      %p202 = por %p200, %p201
      %p204 = scmp.ne.s32.totalorder %s187, %s203
      %p205 = scmp.eq.s32.totalorder %s27, 0
      %p206 = por %p204, %p205
      %p207 = scmp.le.s32.totalorder 1, %s21
      %p208 = scmp.lt.s32.totalorder %s21, 3
      %p209 = pnand %p207, %p208
      %p210 = pneg %p209
      // Predicated region
      $region9: #{tpu_custom_call.1} parent=5 // pred_check
        _
      $region10: #{tpu_custom_call.1} parent=5 // pred_check_branch
        %212 = sbr.rel (%p209) target = $region12
      $region11: #{tpu_custom_call.1} parent=5 // pred_region
        %s213 = ssub.s32 %s21, 1
        // Predicated region
        $region13: #{tpu_custom_call.1} parent=11 // pred_check
          %p214 = pneg %p68
        $region14: #{tpu_custom_call.1} parent=11 // pred_check_branch
          %216 = sbr.rel (%p214) target = $region16
        $region15: #{tpu_custom_call.1} parent=11 // pred_region
          %s218 = ssub.s32 1024, 1024
          %219 = vsyncadd [#allocation6], %s218
          %s220 = sshll.u32 [#allocation5], 4
          %s221 = int_to_ptr.vmem [resolvable:$true] %s220
          %226 = dma.hbm_to_vmem [thread:$0]  %s1, 1024, %s221, [#allocation6], 64, 64, 4
        $region16: #{tpu_custom_call.1} parent=11 // pred_fallthru
          _
        // Predicated region
        $region17: #{tpu_custom_call.1} parent=11 // pred_check
          %p227 = pneg %p89
        $region18: #{tpu_custom_call.1} parent=11 // pred_check_branch
          %229 = sbr.rel (%p227) target = $region20
        $region19: #{tpu_custom_call.1} parent=11 // pred_region
          _
        $region20: #{tpu_custom_call.1} parent=11 // pred_fallthru
          _
        // Predicated region
        $region21: #{tpu_custom_call.1} parent=11 // pred_check
          %p230 = pneg %p110
        $region22: #{tpu_custom_call.1} parent=11 // pred_check_branch
          %232 = sbr.rel (%p230) target = $region24
        $region23: #{tpu_custom_call.1} parent=11 // pred_region
          %s234 = ssub.s32 1024, 1024
          %235 = vsyncadd [#allocation6], %s234
          %s236 = sshll.u32 [#allocation7], 4
          %s237 = int_to_ptr.vmem [resolvable:$true] %s236
          %242 = dma.hbm_to_vmem [thread:$0]  %s3, 1024, %s237, [#allocation6], 64, 64, 4
        $region24: #{tpu_custom_call.1} parent=11 // pred_fallthru
          _
        // Predicated region
        $region25: #{tpu_custom_call.1} parent=11 // pred_check
          %p243 = pneg %p131
        $region26: #{tpu_custom_call.1} parent=11 // pred_check_branch
          %245 = sbr.rel (%p243) target = $region28
        $region27: #{tpu_custom_call.1} parent=11 // pred_region
          _
        $region28: #{tpu_custom_call.1} parent=11 // pred_fallthru
          _
        // Predicated region
        $region29: #{tpu_custom_call.1} parent=11 // pred_check
          %p246 = pneg %p152
        $region30: #{tpu_custom_call.1} parent=11 // pred_check_branch
          %248 = sbr.rel (%p246) target = $region32
        $region31: #{tpu_custom_call.1} parent=11 // pred_region
          %s250 = ssub.s32 1024, 1024
          %251 = vsyncadd [#allocation9], %s250
          %s252 = sshll.u32 [#allocation8], 4
          %s253 = int_to_ptr.vmem [resolvable:$true] %s252
          %258 = dma.hbm_to_vmem [thread:$0]  %s5, 1024, %s253, [#allocation9], 64, 64, 4
        $region32: #{tpu_custom_call.1} parent=11 // pred_fallthru
          _
        // Predicated region
        $region33: #{tpu_custom_call.1} parent=11 // pred_check
          %p259 = pneg %p173
        $region34: #{tpu_custom_call.1} parent=11 // pred_check_branch
          %261 = sbr.rel (%p259) target = $region36
        $region35: #{tpu_custom_call.1} parent=11 // pred_region
          _
        $region36: #{tpu_custom_call.1} parent=11 // pred_fallthru
          _
      $region12: #{tpu_custom_call.1} parent=5 // pred_fallthru
        _
      %p262 = scmp.lt.s32.totalorder %s21, 2
      // Predicated region
      $region37: #{tpu_custom_call.1} parent=5 // pred_check
        %p263 = pneg %p262
      $region38: #{tpu_custom_call.1} parent=5 // pred_check_branch
        %265 = sbr.rel (%p263) target = $region40
      $region39: #{tpu_custom_call.1} parent=5 // pred_region
        // Predicated region
        $region41: #{tpu_custom_call.1} parent=39 // pred_check
          %p266 = pneg %p41
        $region42: #{tpu_custom_call.1} parent=39 // pred_check_branch
          %268 = sbr.rel (%p266) target = $region44
        $region43: #{tpu_custom_call.1} parent=39 // pred_region
          %s269 = sand.u32 %s31, 1
          %s270 = scalar_lea.sflag [#allocation3], %s269
          %s271 = sand.u32 %s31, 1
          %s272 = smul.addr %s271, 16
          %s273 = scalar_lea.vmem [#allocation2], %s272
          %s274 = smul.u32 2, %s21
          %s276 = ssub.s32 256, 256
          %277 = vsyncadd %s270, %s276
          %s278 = smul.addr %s274, 128
          %s279 = scalar_lea.hbm %s0, %s278
          %s280 = sshll.u32 %s273, 4
          %s281 = int_to_ptr.vmem [resolvable:$true] %s280
          %286 = dma.hbm_to_vmem [thread:$0]  %s279, 256, %s281, %s270, 128, 128, 8
        $region44: #{tpu_custom_call.1} parent=39 // pred_fallthru
          _
      $region40: #{tpu_custom_call.1} parent=5 // pred_fallthru
        _
      %p287 = scmp.le.s32.totalorder 1, %s21
      %p288 = scmp.lt.s32.totalorder %s21, 3
      %p289 = pnand %p287, %p288
      %p290 = pneg %p289
      // Predicated region
      $region45: #{tpu_custom_call.1} parent=5 // pred_check
        _
      $region46: #{tpu_custom_call.1} parent=5 // pred_check_branch
        %292 = sbr.rel (%p289) target = $region48
      $region47: #{tpu_custom_call.1} parent=5 // pred_region
        %s293 = ssub.s32 %s21, 1
        %s294 = sand.u32 %s34, 1
        %s295 = scalar_lea.sflag [#allocation3], %s294
        %s296 = sand.u32 %s34, 1
        %s297 = smul.addr %s296, 16
        %s298 = scalar_lea.vmem [#allocation2], %s297
        // Predicated region
        $region49: #{tpu_custom_call.1} parent=47 // pred_check
          %p299 = pneg %p47
        $region50: #{tpu_custom_call.1} parent=47 // pred_check_branch
          %301 = sbr.rel (%p299) target = $region52
        $region51: #{tpu_custom_call.1} parent=47 // pred_region
          %302 = dma.done %s295, 256
        $region52: #{tpu_custom_call.1} parent=47 // pred_fallthru
          _
        // Predicated region
        $region53: #{tpu_custom_call.1} parent=47 // pred_check
          %p303 = pneg %p68
        $region54: #{tpu_custom_call.1} parent=47 // pred_check_branch
          %305 = sbr.rel (%p303) target = $region56
        $region55: #{tpu_custom_call.1} parent=47 // pred_region
          %306 = dma.done [#allocation6], 1024
        $region56: #{tpu_custom_call.1} parent=47 // pred_fallthru
          _
        // Predicated region
        $region57: #{tpu_custom_call.1} parent=47 // pred_check
          %p307 = pneg %p110
        $region58: #{tpu_custom_call.1} parent=47 // pred_check_branch
          %309 = sbr.rel (%p307) target = $region60
        $region59: #{tpu_custom_call.1} parent=47 // pred_region
          %310 = dma.done [#allocation6], 1024
        $region60: #{tpu_custom_call.1} parent=47 // pred_fallthru
          _
        // Predicated region
        $region61: #{tpu_custom_call.1} parent=47 // pred_check
          %p311 = pneg %p152
        $region62: #{tpu_custom_call.1} parent=47 // pred_check_branch
          %313 = sbr.rel (%p311) target = $region64
        $region63: #{tpu_custom_call.1} parent=47 // pred_region
          %314 = dma.done [#allocation9], 1024
        $region64: #{tpu_custom_call.1} parent=47 // pred_fallthru
          _
        %s315 = sand.u32 %s34, 1
        %s316 = scalar_lea.sflag [#allocation3], %s315
        %s317 = sand.u32 %s34, 1
        %s318 = smul.addr %s317, 16
        %s319 = scalar_lea.vmem [#allocation2], %s318
        %p320 = pneg %p47
        %p321 = pneg %p44
        %p322 = pneg %p68
        %p323 = pneg %p65
        %p324 = pneg %p89
        %p325 = pneg %p86
        %p326 = pneg %p110
        %p327 = pneg %p107
        %p328 = pneg %p131
        %p329 = pneg %p128
        %p330 = pneg %p152
        %p331 = pneg %p149
        %p332 = pneg %p173
        %p333 = pneg %p170
        %p334 = pneg %p199
        %p335 = pneg %p196
        %s336 = sand.u32 %s186, 1
        %s337 = scalar_lea.sflag [#allocation4], %s336
        %s338 = sand.u32 %s186, 1
        %s339 = smul.addr %s338, 16
        %s340 = scalar_lea.vmem [#allocation10], %s339
        %s341 = smul.u32 2, %s26
        %s342 = smul.u32 2, %s26
        %v344 = vld [vmem:[%s298] sm:$0xff]
        %v345 = vld [vmem:[%s298 + $0x8] sm:$0xff]
        %v346 = vpack.c.bf16 %v345, %v344
        %v347 = vld [vmem:[#allocation5] sm:$0xf]
        %v348 = vld [vmem:[#allocation5 + $0x4] sm:$0xf]
        %v349 = vld [vmem:[#allocation5 + $0x8] sm:$0xf]
        %v350 = vld [vmem:[#allocation5 + $0xc] sm:$0xf]
        %v351 = vld [vmem:[#allocation5 + $0x10] sm:$0xf]
        %v352 = vld [vmem:[#allocation5 + $0x14] sm:$0xf]
        %v353 = vld [vmem:[#allocation5 + $0x18] sm:$0xf]
        %v354 = vld [vmem:[#allocation5 + $0x1c] sm:$0xf]
        %v355 = vld [vmem:[#allocation5 + $0x20] sm:$0xf]
        %v356 = vld [vmem:[#allocation5 + $0x24] sm:$0xf]
        %v357 = vld [vmem:[#allocation5 + $0x28] sm:$0xf]
        %v358 = vld [vmem:[#allocation5 + $0x2c] sm:$0xf]
        %v359 = vld [vmem:[#allocation5 + $0x30] sm:$0xf]
        %v360 = vld [vmem:[#allocation5 + $0x34] sm:$0xf]
        %v361 = vld [vmem:[#allocation5 + $0x38] sm:$0xf]
        %v362 = vld [vmem:[#allocation5 + $0x3c] sm:$0xf]
        %v363 = vld [vmem:[%s2] sm:$0x1]
        %v365 = vlaneseq
        %v366 = vshrl.u32 %v365, 7
        %v367 = vsub.s32 0, %v366
        %v368 = vrot.slane %v363, %v367
        %v386 = vunpack.c.l.b16 %v347
        %v387 = vunpack.c.l.b16 %v348
        %v388 = vunpack.c.l.b16 %v349
        %v389 = vunpack.c.l.b16 %v350
        %v390 = vunpack.c.l.b16 %v351
        %v391 = vunpack.c.l.b16 %v352
        %v392 = vunpack.c.l.b16 %v353
        %v393 = vunpack.c.l.b16 %v354
        %v394 = vunpack.c.l.b16 %v355
        %v395 = vunpack.c.l.b16 %v356
        %v396 = vunpack.c.l.b16 %v357
        %v397 = vunpack.c.l.b16 %v358
        %v398 = vunpack.c.l.b16 %v359
        %v399 = vunpack.c.l.b16 %v360
        %v400 = vunpack.c.l.b16 %v361
        %v401 = vunpack.c.l.b16 %v362
        %v402 = vpack.c.b16 %v387, %v386
        %v403 = vpack.c.b16 %v389, %v388
        %v404 = vpack.c.b16 %v391, %v390
        %v405 = vpack.c.b16 %v393, %v392
        %v406 = vpack.c.b16 %v395, %v394
        %v407 = vpack.c.b16 %v397, %v396
        %v408 = vpack.c.b16 %v399, %v398
        %v409 = vpack.c.b16 %v401, %v400
        %418 = vmatprep.subr.bf16.mxu0 0
        %419 = vmatpush1.bf16.msra.mxu0 %v409
        %420 = vmatprep.subr.bf16.mxu0 0
        %421 = vmatpush1.bf16.msra.mxu0 %v408
        %422 = vmatprep.subr.bf16.mxu0 0
        %423 = vmatpush1.bf16.msra.mxu0 %v407
        %424 = vmatprep.subr.bf16.mxu0 0
        %425 = vmatpush1.bf16.msra.mxu0 %v406
        %426 = vmatprep.subr.bf16.mxu0 0
        %427 = vmatpush1.bf16.msra.mxu0 %v405
        %428 = vmatprep.subr.bf16.mxu0 0
        %429 = vmatpush1.bf16.msra.mxu0 %v404
        %430 = vmatprep.subr.bf16.mxu0 0
        %431 = vmatpush1.bf16.msra.mxu0 %v403
        %432 = vmatprep.subr.bf16.mxu0 0
        %433 = vmatpush1.bf16.msra.mxu0 %v402
        %434 = vmatprep.subr.bf16.mxu0 0
        %435 = vmatpush2.bf16.msra.mxu0 0
        %436 = vmatprep.subr.bf16.mxu0 0
        %437 = vmatpush2.bf16.msra.mxu0 0
        %438 = vmatprep.subr.bf16.mxu0 0
        %439 = vmatpush2.bf16.msra.mxu0 0
        %440 = vmatprep.subr.bf16.mxu0 0
        %441 = vmatpush2.bf16.msra.mxu0 0
        %442 = vmatprep.subr.bf16.mxu0 0
        %443 = vmatpush2.bf16.msra.mxu0 0
        %444 = vmatprep.subr.bf16.mxu0 0
        %445 = vmatpush2.bf16.msra.mxu0 0
        %446 = vmatprep.subr.bf16.mxu0 0
        %447 = vmatpush2.bf16.msra.mxu0 0
        %448 = vmatprep.subr.bf16.mxu0 0
        %449 = vmatpush2.bf16.msra.mxu0 0
        %450 = vmatprep.mubr.bf16.mxu0 0
        %451 = vmatmul.mubr.bf16.gmra.mxu0 %v346
        %v452 = vpop.f32.mrf.mxu0
        %v453 = vadd.f32 %v368, %v452
        %v454 = vpop.f32.mrf.mxu0
        %v455 = vpop.f32.mrf.mxu0
        %v456 = vadd.f32 %v368, %v455
        %v457 = vpop.f32.mrf.mxu0
        %458 = vdwg.mxu0
        %v459 = vxor.u32 %v453, 2147483648
        %v460 = vxor.u32 %v456, 2147483648
        %v461 = vmul.f32 %v459, 1.442695
        %v462 = vpow.pop %v461
        %v463 = vmul.f32 %v460, 1.442695
        %v464 = vpow.pop %v463
        %v465 = vadd.f32 %v462, 1.0
        %v466 = vadd.f32 %v464, 1.0
        %v467 = vrcp.pop %v465
        %v468 = vmul.f32 1.0, %v467
        %v469 = vrcp.pop %v466
        %v470 = vmul.f32 1.0, %v469
        %v471 = vmul.f32 %v453, %v468
        %v472 = vmul.f32 %v456, %v470
        %v473 = vpack.c.bf16 %v472, %v471
        %v474 = vld [vmem:[#allocation7] sm:$0xf]
        %v475 = vld [vmem:[#allocation7 + $0x4] sm:$0xf]
        %v476 = vld [vmem:[#allocation7 + $0x8] sm:$0xf]
        %v477 = vld [vmem:[#allocation7 + $0xc] sm:$0xf]
        %v478 = vld [vmem:[#allocation7 + $0x10] sm:$0xf]
        %v479 = vld [vmem:[#allocation7 + $0x14] sm:$0xf]
        %v480 = vld [vmem:[#allocation7 + $0x18] sm:$0xf]
        %v481 = vld [vmem:[#allocation7 + $0x1c] sm:$0xf]
        %v482 = vld [vmem:[#allocation7 + $0x20] sm:$0xf]
        %v483 = vld [vmem:[#allocation7 + $0x24] sm:$0xf]
        %v484 = vld [vmem:[#allocation7 + $0x28] sm:$0xf]
        %v485 = vld [vmem:[#allocation7 + $0x2c] sm:$0xf]
        %v486 = vld [vmem:[#allocation7 + $0x30] sm:$0xf]
        %v487 = vld [vmem:[#allocation7 + $0x34] sm:$0xf]
        %v488 = vld [vmem:[#allocation7 + $0x38] sm:$0xf]
        %v489 = vld [vmem:[#allocation7 + $0x3c] sm:$0xf]
        %v490 = vld [vmem:[%s4] sm:$0x1]
        %v492 = vlaneseq
        %v493 = vshrl.u32 %v492, 7
        %v494 = vsub.s32 0, %v493
        %v495 = vrot.slane %v490, %v494
        %v513 = vunpack.c.l.b16 %v474
        %v514 = vunpack.c.l.b16 %v475
        %v515 = vunpack.c.l.b16 %v476
        %v516 = vunpack.c.l.b16 %v477
        %v517 = vunpack.c.l.b16 %v478
        %v518 = vunpack.c.l.b16 %v479
        %v519 = vunpack.c.l.b16 %v480
        %v520 = vunpack.c.l.b16 %v481
        %v521 = vunpack.c.l.b16 %v482
        %v522 = vunpack.c.l.b16 %v483
        %v523 = vunpack.c.l.b16 %v484
        %v524 = vunpack.c.l.b16 %v485
        %v525 = vunpack.c.l.b16 %v486
        %v526 = vunpack.c.l.b16 %v487
        %v527 = vunpack.c.l.b16 %v488
        %v528 = vunpack.c.l.b16 %v489
        %v529 = vpack.c.b16 %v514, %v513
        %v530 = vpack.c.b16 %v516, %v515
        %v531 = vpack.c.b16 %v518, %v517
        %v532 = vpack.c.b16 %v520, %v519
        %v533 = vpack.c.b16 %v522, %v521
        %v534 = vpack.c.b16 %v524, %v523
        %v535 = vpack.c.b16 %v526, %v525
        %v536 = vpack.c.b16 %v528, %v527
        %545 = vmatprep.subr.bf16.mxu0 0
        %546 = vmatpush1.bf16.msra.mxu0 %v536
        %547 = vmatprep.subr.bf16.mxu0 0
        %548 = vmatpush1.bf16.msra.mxu0 %v535
        %549 = vmatprep.subr.bf16.mxu0 0
        %550 = vmatpush1.bf16.msra.mxu0 %v534
        %551 = vmatprep.subr.bf16.mxu0 0
        %552 = vmatpush1.bf16.msra.mxu0 %v533
        %553 = vmatprep.subr.bf16.mxu0 0
        %554 = vmatpush1.bf16.msra.mxu0 %v532
        %555 = vmatprep.subr.bf16.mxu0 0
        %556 = vmatpush1.bf16.msra.mxu0 %v531
        %557 = vmatprep.subr.bf16.mxu0 0
        %558 = vmatpush1.bf16.msra.mxu0 %v530
        %559 = vmatprep.subr.bf16.mxu0 0
        %560 = vmatpush1.bf16.msra.mxu0 %v529
        %561 = vmatprep.subr.bf16.mxu0 0
        %562 = vmatpush2.bf16.msra.mxu0 0
        %563 = vmatprep.subr.bf16.mxu0 0
        %564 = vmatpush2.bf16.msra.mxu0 0
        %565 = vmatprep.subr.bf16.mxu0 0
        %566 = vmatpush2.bf16.msra.mxu0 0
        %567 = vmatprep.subr.bf16.mxu0 0
        %568 = vmatpush2.bf16.msra.mxu0 0
        %569 = vmatprep.subr.bf16.mxu0 0
        %570 = vmatpush2.bf16.msra.mxu0 0
        %571 = vmatprep.subr.bf16.mxu0 0
        %572 = vmatpush2.bf16.msra.mxu0 0
        %573 = vmatprep.subr.bf16.mxu0 0
        %574 = vmatpush2.bf16.msra.mxu0 0
        %575 = vmatprep.subr.bf16.mxu0 0
        %576 = vmatpush2.bf16.msra.mxu0 0
        %577 = vmatprep.mubr.bf16.mxu0 0
        %578 = vmatmul.mubr.bf16.gmra.mxu0 %v473
        %v579 = vpop.f32.mrf.mxu0
        %v580 = vadd.f32 %v495, %v579
        %v581 = vpop.f32.mrf.mxu0
        %v582 = vpop.f32.mrf.mxu0
        %v583 = vadd.f32 %v495, %v582
        %v584 = vpop.f32.mrf.mxu0
        %585 = vdwg.mxu0
        %v586 = vxor.u32 %v580, 2147483648
        %v587 = vxor.u32 %v583, 2147483648
        %v588 = vmul.f32 %v586, 1.442695
        %v589 = vpow.pop %v588
        %v590 = vmul.f32 %v587, 1.442695
        %v591 = vpow.pop %v590
        %v592 = vadd.f32 %v589, 1.0
        %v593 = vadd.f32 %v591, 1.0
        %v594 = vrcp.pop %v592
        %v595 = vmul.f32 1.0, %v594
        %v596 = vrcp.pop %v593
        %v597 = vmul.f32 1.0, %v596
        %v598 = vmul.f32 %v580, %v595
        %v599 = vmul.f32 %v583, %v597
        %v600 = vpack.c.bf16 %v599, %v598
        %v601 = vld [vmem:[#allocation8] sm:$0xf]
        %v602 = vld [vmem:[#allocation8 + $0x4] sm:$0xf]
        %v603 = vld [vmem:[#allocation8 + $0x8] sm:$0xf]
        %v604 = vld [vmem:[#allocation8 + $0xc] sm:$0xf]
        %v605 = vld [vmem:[#allocation8 + $0x10] sm:$0xf]
        %v606 = vld [vmem:[#allocation8 + $0x14] sm:$0xf]
        %v607 = vld [vmem:[#allocation8 + $0x18] sm:$0xf]
        %v608 = vld [vmem:[#allocation8 + $0x1c] sm:$0xf]
        %v609 = vld [vmem:[#allocation8 + $0x20] sm:$0xf]
        %v610 = vld [vmem:[#allocation8 + $0x24] sm:$0xf]
        %v611 = vld [vmem:[#allocation8 + $0x28] sm:$0xf]
        %v612 = vld [vmem:[#allocation8 + $0x2c] sm:$0xf]
        %v613 = vld [vmem:[#allocation8 + $0x30] sm:$0xf]
        %v614 = vld [vmem:[#allocation8 + $0x34] sm:$0xf]
        %v615 = vld [vmem:[#allocation8 + $0x38] sm:$0xf]
        %v616 = vld [vmem:[#allocation8 + $0x3c] sm:$0xf]
        %v617 = vld [vmem:[%s6] sm:$0x1]
        %v619 = vlaneseq
        %v620 = vshrl.u32 %v619, 7
        %v621 = vsub.s32 0, %v620
        %v622 = vrot.slane %v617, %v621
        %v640 = vunpack.c.l.b16 %v601
        %v641 = vunpack.c.l.b16 %v602
        %v642 = vunpack.c.l.b16 %v603
        %v643 = vunpack.c.l.b16 %v604
        %v644 = vunpack.c.l.b16 %v605
        %v645 = vunpack.c.l.b16 %v606
        %v646 = vunpack.c.l.b16 %v607
        %v647 = vunpack.c.l.b16 %v608
        %v648 = vunpack.c.l.b16 %v609
        %v649 = vunpack.c.l.b16 %v610
        %v650 = vunpack.c.l.b16 %v611
        %v651 = vunpack.c.l.b16 %v612
        %v652 = vunpack.c.l.b16 %v613
        %v653 = vunpack.c.l.b16 %v614
        %v654 = vunpack.c.l.b16 %v615
        %v655 = vunpack.c.l.b16 %v616
        %v656 = vpack.c.b16 %v641, %v640
        %v657 = vpack.c.b16 %v643, %v642
        %v658 = vpack.c.b16 %v645, %v644
        %v659 = vpack.c.b16 %v647, %v646
        %v660 = vpack.c.b16 %v649, %v648
        %v661 = vpack.c.b16 %v651, %v650
        %v662 = vpack.c.b16 %v653, %v652
        %v663 = vpack.c.b16 %v655, %v654
        %672 = vmatprep.subr.bf16.mxu0 0
        %673 = vmatpush1.bf16.msra.mxu0 %v663
        %674 = vmatprep.subr.bf16.mxu0 0
        %675 = vmatpush1.bf16.msra.mxu0 %v662
        %676 = vmatprep.subr.bf16.mxu0 0
        %677 = vmatpush1.bf16.msra.mxu0 %v661
        %678 = vmatprep.subr.bf16.mxu0 0
        %679 = vmatpush1.bf16.msra.mxu0 %v660
        %680 = vmatprep.subr.bf16.mxu0 0
        %681 = vmatpush1.bf16.msra.mxu0 %v659
        %682 = vmatprep.subr.bf16.mxu0 0
        %683 = vmatpush1.bf16.msra.mxu0 %v658
        %684 = vmatprep.subr.bf16.mxu0 0
        %685 = vmatpush1.bf16.msra.mxu0 %v657
        %686 = vmatprep.subr.bf16.mxu0 0
        %687 = vmatpush1.bf16.msra.mxu0 %v656
        %688 = vmatprep.subr.bf16.mxu0 0
        %689 = vmatpush2.bf16.msra.mxu0 0
        %690 = vmatprep.subr.bf16.mxu0 0
        %691 = vmatpush2.bf16.msra.mxu0 0
        %692 = vmatprep.subr.bf16.mxu0 0
        %693 = vmatpush2.bf16.msra.mxu0 0
        %694 = vmatprep.subr.bf16.mxu0 0
        %695 = vmatpush2.bf16.msra.mxu0 0
        %696 = vmatprep.subr.bf16.mxu0 0
        %697 = vmatpush2.bf16.msra.mxu0 0
        %698 = vmatprep.subr.bf16.mxu0 0
        %699 = vmatpush2.bf16.msra.mxu0 0
        %700 = vmatprep.subr.bf16.mxu0 0
        %701 = vmatpush2.bf16.msra.mxu0 0
        %702 = vmatprep.subr.bf16.mxu0 0
        %703 = vmatpush2.bf16.msra.mxu0 0
        %704 = vmatprep.mubr.bf16.mxu0 0
        %705 = vmatmul.mubr.bf16.gmra.mxu0 %v600
        %v706 = vpop.f32.mrf.mxu0
        %v707 = vadd.f32 %v622, %v706
        %v708 = vpop.f32.mrf.mxu0
        %v709 = vpop.f32.mrf.mxu0
        %v710 = vadd.f32 %v622, %v709
        %v711 = vpop.f32.mrf.mxu0
        %712 = vdwg.mxu0
        %713 = vst [vmem:[%s340] sm:$0xff] %v707
        %714 = vst [vmem:[%s340 + $0x8] sm:$0xff] %v710
        %s715 = sand.u32 %s186, 1
        %s716 = scalar_lea.sflag [#allocation4], %s715
        %s717 = sand.u32 %s186, 1
        %s718 = smul.addr %s717, 16
        %s719 = scalar_lea.vmem [#allocation10], %s718
        // Predicated region
        $region65: #{tpu_custom_call.1} parent=47 // pred_check
          %p720 = pneg %p196
        $region66: #{tpu_custom_call.1} parent=47 // pred_check_branch
          %722 = sbr.rel (%p720) target = $region68
        $region67: #{tpu_custom_call.1} parent=47 // pred_region
          %s723 = smul.u32 2, %s26
          %s725 = ssub.s32 256, 256
          %726 = vsyncadd %s716, %s725
          %s727 = smul.addr %s723, 128
          %s728 = scalar_lea.hbm %s7, %s727
          %s729 = sshll.u32 %s719, 4
          %s730 = int_to_ptr.vmem [resolvable:$true] %s729
          %735 = dma.vmem_to_hbm [thread:$0]  %s730, 256, %s728, %s716, 128, 128, 8
        $region68: #{tpu_custom_call.1} parent=47 // pred_fallthru
          _
      $region48: #{tpu_custom_call.1} parent=5 // pred_fallthru
        _
      %p736 = scmp.le.s32.totalorder 2, %s21
      // Predicated region
      $region69: #{tpu_custom_call.1} parent=5 // pred_check
        %p737 = pneg %p736
      $region70: #{tpu_custom_call.1} parent=5 // pred_check_branch
        %739 = sbr.rel (%p737) target = $region72
      $region71: #{tpu_custom_call.1} parent=5 // pred_region
        %s740 = ssub.s32 %s21, 2
        // Predicated region
        $region73: #{tpu_custom_call.1} parent=71 // pred_check
          %p741 = pneg %p202
        $region74: #{tpu_custom_call.1} parent=71 // pred_check_branch
          %743 = sbr.rel (%p741) target = $region76
        $region75: #{tpu_custom_call.1} parent=71 // pred_region
          %s744 = sand.u32 %s187, 1
          %s745 = scalar_lea.sflag [#allocation4], %s744
          %s746 = sand.u32 %s187, 1
          %s747 = smul.addr %s746, 16
          %s748 = scalar_lea.vmem [#allocation10], %s747
          %749 = dma.done %s745, 256
        $region76: #{tpu_custom_call.1} parent=71 // pred_fallthru
          _
      $region72: #{tpu_custom_call.1} parent=5 // pred_fallthru
        _
    $region6: #{tpu_custom_call.1} parent=1 // loop_footer
      %s25 = sadd.s32 1, %s21
    $region7: #{tpu_custom_call.1} parent=1 // loop_footer_branch
      %20 = sbr.rel target = $region3
    $region8: #{tpu_custom_call.1} parent=1 // loop_exit
      _
    %750 = vsyncpa [#allocation3], 1
    %s751 = scalar_lea.sflag [#allocation3], 1
    %752 = vsyncpa %s751, 1
    %753 = vsyncpa [#allocation6], 1
    %754 = vsyncpa [#allocation9], 1
    %755 = vsyncpa [#allocation4], 1
    %s756 = scalar_lea.sflag [#allocation4], 1
    %757 = vsyncpa %s756, 1

</llo_original>
